<compile_context>
chip_gen: v7x
topology: tpu7x:2x2x1
jax: 0.10.0
libtpu: 0.0.40
codegen_flags: <defaults>
</compile_context>

<pallas_src>
import functools

import jax
import jax.numpy as jnp
from jax import lax
from jax.experimental import pallas as pl
from jax.experimental.pallas import tpu as pltpu


# ----------------------------------------------------------------------------
# Pallas kernel: one invocation processes the whole (T, B) sequence.
# ----------------------------------------------------------------------------
def _qnet_kernel(x_ref, h0_ref, c0_ref,
                 w1t_ref, b1_ref, wiht_ref, blstm_ref, whht_ref,
                 w2t_ref, b2_ref,
                 y_ref, hn_ref, cn_ref,
                 gx_sc, hs_sc,
                 *, compute_dtype):
    B, H = h0_ref.shape
    TB = x_ref.shape[0]
    T = TB // B
    cd = compute_dtype

    # ---- Hoisted input projection for ALL time steps (two big matmuls) ----
    x = x_ref[...].astype(cd)                                       # (T*B, S)
    a1 = jnp.dot(x, w1t_ref[...].astype(cd),
                 preferred_element_type=jnp.float32)                # (T*B, H)
    a1 = jnp.maximum(a1 + b1_ref[...], 0.0)                         # ReLU
    gates_x = jnp.dot(a1.astype(cd), wiht_ref[...].astype(cd),
                      preferred_element_type=jnp.float32) + blstm_ref[...]
    gx_sc[...] = gates_x                                            # (T*B, 4H)

    # ---- Recurrence: only h_{t-1} @ Whh^T + gate math per step ----
    whht = whht_ref[...].astype(cd)                                 # (H, 4H)

    # Static lane mask (hoisted out of the loop): lanes [2H, 3H) are the 'g'
    # (cell candidate) gate -> tanh; everything else -> sigmoid.
    lane = lax.broadcasted_iota(jnp.int32, (B, 4 * H), 1)
    g_mask = (lane >= 2 * H) & (lane < 3 * H)

    h0 = h0_ref[...].astype(jnp.float32)
    c0 = c0_ref[...].astype(jnp.float32)

    def step(t, carry):
        h_prev, c_prev = carry
        row = t * B
        gates = gx_sc[pl.ds(row, B), :] + jnp.dot(
            h_prev.astype(cd), whht, preferred_element_type=jnp.float32)
        # Two full-vreg EUP passes blended with the static lane mask
        # (PyTorch gate order along lanes: i, f, g, o).
        act = jnp.where(g_mask, jnp.tanh(gates), jax.nn.sigmoid(gates))
        i_g = act[:, 0 * H:1 * H]
        f_g = act[:, 1 * H:2 * H]
        g_g = act[:, 2 * H:3 * H]
        o_g = act[:, 3 * H:4 * H]
        c_new = f_g * c_prev + i_g * g_g
        h_new = o_g * jnp.tanh(c_new)
        hs_sc[pl.ds(row, B), :] = h_new
        return h_new, c_new

    h_fin, c_fin = lax.fori_loop(0, T, step, (h0, c0), unroll=True)

    # ---- Hoisted output projection: one matmul, one store ----
    y = jnp.dot(hs_sc[...].astype(cd), w2t_ref[...].astype(cd),
                preferred_element_type=jnp.float32) + b2_ref[...]
    y_ref[...] = y.astype(y_ref.dtype)
    hn_ref[...] = h_fin.astype(hn_ref.dtype)
    cn_ref[...] = c_fin.astype(cn_ref.dtype)


def q_network_forward(x, h, c, params, *, mxu_dtype=None):
    """x: (B, T, state_space), h/c: (1, B, hidden).  Returns (y, new_h, new_c).

    mxu_dtype: optional dtype (e.g. jnp.bfloat16 on v6e/v7x) for MXU operands;
    accumulation and all gate/cell math stay in float32.
    """
    B, T, S = x.shape
    H = params["w1"].shape[0]
    A = params["w2"].shape[0]

    if T == 0:  # guard: pl.when-free kernel still never runs; avoid undefined outs
        return jnp.zeros((B, 0, A), x.dtype), h, c

    compute_dtype = jnp.float32 if mxu_dtype is None else mxu_dtype

    # Time-major, flattened so all T*B rows feed one batched matmul.
    x2d = jnp.transpose(x, (1, 0, 2)).reshape(T * B, S)
    h0 = h[0]                                   # (B, H)
    c0 = c[0]

    # Pre-transpose weights once in the wrapper; pre-sum the two LSTM biases.
    w1t = params["w1"].T                        # (S, H)
    wiht = params["wih"].T                      # (H, 4H)
    whht = params["whh"].T                      # (H, 4H)
    w2t = params["w2"].T                        # (H, A)
    blstm = params["bih"] + params["bhh"]       # (1, 4H)

    vmem = lambda: pl.BlockSpec(memory_space=pltpu.MemorySpace.VMEM)

    y2d, hn, cn = pl.pallas_call(
        functools.partial(_qnet_kernel, compute_dtype=compute_dtype),
        out_shape=(
            jax.ShapeDtypeStruct((T * B, A), x.dtype),   # y (time-major, flat)
            jax.ShapeDtypeStruct((B, H), x.dtype),       # h_n
            jax.ShapeDtypeStruct((B, H), x.dtype),       # c_n
        ),
        in_specs=[vmem() for _ in range(10)],
        out_specs=(vmem(), vmem(), vmem()),
        scratch_shapes=[
            pltpu.VMEM((T * B, 4 * H), jnp.float32),     # precomputed gates_x
            pltpu.VMEM((T * B, H), jnp.float32),         # per-step hidden states
        ],
    )(x2d, h0, c0, w1t, params["b1"], wiht, blstm, whht, w2t, params["b2"])

    y = jnp.transpose(y2d.reshape(T, B, A), (1, 0, 2))   # back to (B, T, A)
    return y, hn[None], cn[None]


# ----------------------------------------------------------------------------
# Pure-JAX reference (mirrors PyTorch nn.Linear / nn.LSTM semantics).
# ----------------------------------------------------------------------------
def q_network_ref(x, h, c, p):
    a1 = jax.nn.relu(jnp.einsum("bts,hs->bth", x, p["w1"]) + p["b1"])

    def step(carry, xt):
        hh, cc = carry
        gates = (xt @ p["wih"].T + p["bih"][0]
                 + hh @ p["whh"].T + p["bhh"][0])
        i, f, g, o = jnp.split(gates, 4, axis=-1)
        i, f, o = jax.nn.sigmoid(i), jax.nn.sigmoid(f), jax.nn.sigmoid(o)
        g = jnp.tanh(g)
        cc = f * cc + i * g
        hh = o * jnp.tanh(cc)
        return (hh, cc), hh

    (hn, cn), hs = lax.scan(step, (h[0], c[0]), jnp.transpose(a1, (1, 0, 2)))
    y = jnp.einsum("tbh,ah->bta", hs, p["w2"]) + p["b2"][0]
    return y, hn[None], cn[None]


def init_params(key, state_space, hidden_space, action_space, dtype=jnp.float32):
    ks = jax.random.split(key, 8)

    def u(k, shape, fan_in):
        bound = 1.0 / jnp.sqrt(jnp.asarray(fan_in, dtype))
        return jax.random.uniform(k, shape, dtype, -bound, bound)

    H, S, A = hidden_space, state_space, action_space
    return {
        "w1":  u(ks[0], (H, S), S),
        "b1":  u(ks[1], (1, H), S),
        "wih": u(ks[2], (4 * H, H), H),
        "bih": u(ks[3], (1, 4 * H), H),
        "whh": u(ks[4], (4 * H, H), H),
        "bhh": u(ks[5], (1, 4 * H), H),
        "w2":  u(ks[6], (A, H), H),
        "b2":  u(ks[7], (1, A), H),
    }


if __name__ == "__main__":
    B, T = 2, 8
    STATE_SPACE, HIDDEN_SPACE, ACTION_SPACE = 16, 32, 4

    key = jax.random.PRNGKey(0)
    k_p, k_x = jax.random.split(key)
    params = init_params(k_p, STATE_SPACE, HIDDEN_SPACE, ACTION_SPACE)

    x = jax.random.normal(k_x, (B, T, STATE_SPACE), jnp.float32)
    h0 = jnp.zeros((1, B, HIDDEN_SPACE), jnp.float32)   # init_hidden_state(training=True)
    c0 = jnp.zeros((1, B, HIDDEN_SPACE), jnp.float32)

    fwd = jax.jit(q_network_forward)
    y, hn, cn = fwd(x, h0, c0, params)
    jax.block_until_ready((y, hn, cn))

    y_ref, hn_ref, cn_ref = q_network_ref(x, h0, c0, params)
    assert jnp.allclose(y, y_ref, atol=1e-5, rtol=1e-5)
    assert jnp.allclose(hn, hn_ref, atol=1e-5, rtol=1e-5)
    assert jnp.allclose(cn, cn_ref, atol=1e-5, rtol=1e-5)

    print("KERNEL_OK")
</pallas_src>

<mosaic_0001>
module attributes {stable_mosaic.version = 11 : i64} {
  func.func @_qnet_kernel(%arg0: memref<16x16xf32, #tpu.memory_space<vmem>>, %arg1: memref<2x32xf32, #tpu.memory_space<vmem>>, %arg2: memref<2x32xf32, #tpu.memory_space<vmem>>, %arg3: memref<16x32xf32, #tpu.memory_space<vmem>>, %arg4: memref<1x32xf32, #tpu.memory_space<vmem>>, %arg5: memref<32x128xf32, #tpu.memory_space<vmem>>, %arg6: memref<1x128xf32, #tpu.memory_space<vmem>>, %arg7: memref<32x128xf32, #tpu.memory_space<vmem>>, %arg8: memref<32x4xf32, #tpu.memory_space<vmem>>, %arg9: memref<1x4xf32, #tpu.memory_space<vmem>>, %arg10: memref<16x4xf32, #tpu.memory_space<vmem>>, %arg11: memref<2x32xf32, #tpu.memory_space<vmem>>, %arg12: memref<2x32xf32, #tpu.memory_space<vmem>>, %arg13: memref<16x128xf32, #tpu.memory_space<vmem>>, %arg14: memref<16x32xf32, #tpu.memory_space<vmem>>) attributes {dimension_semantics = [], scalar_prefetch = 0 : i64, scratch_operands = 2 : i64, tpu.core_type = #tpu.core_type<tc>} {
    %c0 = arith.constant 0 : index
    %c0_0 = arith.constant 0 : index
    %0 = vector.load %arg0[%c0, %c0_0] : memref<16x16xf32, #tpu.memory_space<vmem>>, vector<16x16xf32>
    %c0_1 = arith.constant 0 : index
    %c0_2 = arith.constant 0 : index
    %1 = vector.load %arg3[%c0_1, %c0_2] : memref<16x32xf32, #tpu.memory_space<vmem>>, vector<16x32xf32>
    %cst = arith.constant dense<0.000000e+00> : vector<16x32xf32>
    %2 = tpu.matmul %0, %1, %cst {dimension_numbers = #tpu.dot_dimension_numbers<[1], [0], [0], [1], [0, 0, 1, 1], [], []>} : vector<16x16xf32>, vector<16x32xf32>, vector<16x32xf32> -> vector<16x32xf32>
    %c0_3 = arith.constant 0 : index
    %c0_4 = arith.constant 0 : index
    %3 = vector.load %arg4[%c0_3, %c0_4] : memref<1x32xf32, #tpu.memory_space<vmem>>, vector<1x32xf32>
    %4 = vector.broadcast %3 : vector<1x32xf32> to vector<16x32xf32>
    %5 = arith.addf %2, %4 : vector<16x32xf32>
    %cst_5 = arith.constant 0.000000e+00 : f32
    %6 = vector.broadcast %cst_5 : f32 to vector<16x32xf32>
    %7 = arith.maximumf %5, %6 : vector<16x32xf32>
    %c0_6 = arith.constant 0 : index
    %c0_7 = arith.constant 0 : index
    %8 = vector.load %arg5[%c0_6, %c0_7] : memref<32x128xf32, #tpu.memory_space<vmem>>, vector<32x128xf32>
    %cst_8 = arith.constant dense<0.000000e+00> : vector<16x128xf32>
    %9 = tpu.matmul %7, %8, %cst_8 {dimension_numbers = #tpu.dot_dimension_numbers<[1], [0], [0], [1], [0, 0, 1, 1], [], []>} : vector<16x32xf32>, vector<32x128xf32>, vector<16x128xf32> -> vector<16x128xf32>
    %c0_9 = arith.constant 0 : index
    %c0_10 = arith.constant 0 : index
    %10 = vector.load %arg6[%c0_9, %c0_10] : memref<1x128xf32, #tpu.memory_space<vmem>>, vector<1x128xf32>
    %11 = vector.broadcast %10 : vector<1x128xf32> to vector<16x128xf32>
    %12 = arith.addf %9, %11 : vector<16x128xf32>
    %c0_11 = arith.constant 0 : index
    %c0_12 = arith.constant 0 : index
    %13 = vector.load %arg13[%c0_11, %c0_12] : memref<16x128xf32, #tpu.memory_space<vmem>>, vector<16x128xf32>
    tpu.vector_store %arg13[%c0_11, %c0_12], %12 {strides = array<i32>} : memref<16x128xf32, #tpu.memory_space<vmem>>, vector<16x128xf32>,
    %c0_13 = arith.constant 0 : index
    %c0_14 = arith.constant 0 : index
    %14 = vector.load %arg7[%c0_13, %c0_14] : memref<32x128xf32, #tpu.memory_space<vmem>>, vector<32x128xf32>
    %15 = tpu.iota {dimensions = array<i32: 1>} : vector<2x128xi32>
    %c64_i32 = arith.constant 64 : i32
    %16 = vector.broadcast %c64_i32 : i32 to vector<2x128xi32>
    %17 = arith.cmpi sge, %15, %16 : vector<2x128xi32>
    %c96_i32 = arith.constant 96 : i32
    %18 = vector.broadcast %c96_i32 : i32 to vector<2x128xi32>
    %19 = arith.cmpi slt, %15, %18 : vector<2x128xi32>
    %20 = arith.andi %17, %19 : vector<2x128xi1>
    %c0_15 = arith.constant 0 : index
    %c0_16 = arith.constant 0 : index
    %21 = vector.load %arg1[%c0_15, %c0_16] : memref<2x32xf32, #tpu.memory_space<vmem>>, vector<2x32xf32>
    %c0_17 = arith.constant 0 : index
    %c0_18 = arith.constant 0 : index
    %22 = vector.load %arg2[%c0_17, %c0_18] : memref<2x32xf32, #tpu.memory_space<vmem>>, vector<2x32xf32>
    %c0_i32 = arith.constant 0 : i32
    %c2_i32 = arith.constant 2 : i32
    %23 = arith.muli %c0_i32, %c2_i32 : i32
    %24 = arith.index_cast %23 : i32 to index
    %c0_19 = arith.constant 0 : index
    %25 = vector.load %arg13[%24, %c0_19] : memref<16x128xf32, #tpu.memory_space<vmem>>, vector<2x128xf32>
    %cst_20 = arith.constant dense<0.000000e+00> : vector<2x128xf32>
    %26 = tpu.matmul %21, %14, %cst_20 {dimension_numbers = #tpu.dot_dimension_numbers<[1], [0], [0], [1], [0, 0, 1, 1], [], []>} : vector<2x32xf32>, vector<32x128xf32>, vector<2x128xf32> -> vector<2x128xf32>
    %27 = arith.addf %25, %26 : vector<2x128xf32>
    %28 = math.tanh %27 : vector<2x128xf32>
    %29 = arith.negf %27 : vector<2x128xf32>
    %30 = math.exp %29 : vector<2x128xf32>
    %cst_21 = arith.constant 1.000000e+00 : f32
    %31 = vector.broadcast %cst_21 : f32 to vector<2x128xf32>
    %32 = arith.addf %31, %30 : vector<2x128xf32>
    %33 = arith.divf %31, %32 : vector<2x128xf32>
    %34 = arith.select %20, %28, %33 : vector<2x128xi1>, vector<2x128xf32>
    %35 = vector.extract_strided_slice %34 {offsets = [0, 0], sizes = [2, 32], strides = [1, 1]} : vector<2x128xf32> to vector<2x32xf32>
    %36 = vector.extract_strided_slice %34 {offsets = [0, 32], sizes = [2, 32], strides = [1, 1]} : vector<2x128xf32> to vector<2x32xf32>
    %37 = vector.extract_strided_slice %34 {offsets = [0, 64], sizes = [2, 32], strides = [1, 1]} : vector<2x128xf32> to vector<2x32xf32>
    %38 = vector.extract_strided_slice %34 {offsets = [0, 96], sizes = [2, 32], strides = [1, 1]} : vector<2x128xf32> to vector<2x32xf32>
    %39 = arith.mulf %36, %22 : vector<2x32xf32>
    %40 = arith.mulf %35, %37 : vector<2x32xf32>
    %41 = arith.addf %39, %40 : vector<2x32xf32>
    %42 = math.tanh %41 : vector<2x32xf32>
    %43 = arith.mulf %38, %42 : vector<2x32xf32>
    %44 = arith.index_cast %23 : i32 to index
    %c0_22 = arith.constant 0 : index
    %45 = vector.load %arg14[%44, %c0_22] : memref<16x32xf32, #tpu.memory_space<vmem>>, vector<2x32xf32>
    tpu.vector_store %arg14[%44, %c0_22], %43 {strides = array<i32>} : memref<16x32xf32, #tpu.memory_space<vmem>>, vector<2x32xf32>,
    %c1_i32 = arith.constant 1 : i32
    %c2_i32_23 = arith.constant 2 : i32
    %46 = arith.muli %c1_i32, %c2_i32_23 : i32
    %47 = arith.index_cast %46 : i32 to index
    %c0_24 = arith.constant 0 : index
    %48 = vector.load %arg13[%47, %c0_24] : memref<16x128xf32, #tpu.memory_space<vmem>>, vector<2x128xf32>
    %cst_25 = arith.constant dense<0.000000e+00> : vector<2x128xf32>
    %49 = tpu.matmul %43, %14, %cst_25 {dimension_numbers = #tpu.dot_dimension_numbers<[1], [0], [0], [1], [0, 0, 1, 1], [], []>} : vector<2x32xf32>, vector<32x128xf32>, vector<2x128xf32> -> vector<2x128xf32>
    %50 = arith.addf %48, %49 : vector<2x128xf32>
    %51 = math.tanh %50 : vector<2x128xf32>
    %52 = arith.negf %50 : vector<2x128xf32>
    %53 = math.exp %52 : vector<2x128xf32>
    %cst_26 = arith.constant 1.000000e+00 : f32
    %54 = vector.broadcast %cst_26 : f32 to vector<2x128xf32>
    %55 = arith.addf %54, %53 : vector<2x128xf32>
    %56 = arith.divf %54, %55 : vector<2x128xf32>
    %57 = arith.select %20, %51, %56 : vector<2x128xi1>, vector<2x128xf32>
    %58 = vector.extract_strided_slice %57 {offsets = [0, 0], sizes = [2, 32], strides = [1, 1]} : vector<2x128xf32> to vector<2x32xf32>
    %59 = vector.extract_strided_slice %57 {offsets = [0, 32], sizes = [2, 32], strides = [1, 1]} : vector<2x128xf32> to vector<2x32xf32>
    %60 = vector.extract_strided_slice %57 {offsets = [0, 64], sizes = [2, 32], strides = [1, 1]} : vector<2x128xf32> to vector<2x32xf32>
    %61 = vector.extract_strided_slice %57 {offsets = [0, 96], sizes = [2, 32], strides = [1, 1]} : vector<2x128xf32> to vector<2x32xf32>
    %62 = arith.mulf %59, %41 : vector<2x32xf32>
    %63 = arith.mulf %58, %60 : vector<2x32xf32>
    %64 = arith.addf %62, %63 : vector<2x32xf32>
    %65 = math.tanh %64 : vector<2x32xf32>
    %66 = arith.mulf %61, %65 : vector<2x32xf32>
    %67 = arith.index_cast %46 : i32 to index
    %c0_27 = arith.constant 0 : index
    %68 = vector.load %arg14[%67, %c0_27] : memref<16x32xf32, #tpu.memory_space<vmem>>, vector<2x32xf32>
    tpu.vector_store %arg14[%67, %c0_27], %66 {strides = array<i32>} : memref<16x32xf32, #tpu.memory_space<vmem>>, vector<2x32xf32>,
    %c2_i32_28 = arith.constant 2 : i32
    %c2_i32_29 = arith.constant 2 : i32
    %69 = arith.muli %c2_i32_28, %c2_i32_29 : i32
    %70 = arith.index_cast %69 : i32 to index
    %c0_30 = arith.constant 0 : index
    %71 = vector.load %arg13[%70, %c0_30] : memref<16x128xf32, #tpu.memory_space<vmem>>, vector<2x128xf32>
    %cst_31 = arith.constant dense<0.000000e+00> : vector<2x128xf32>
    %72 = tpu.matmul %66, %14, %cst_31 {dimension_numbers = #tpu.dot_dimension_numbers<[1], [0], [0], [1], [0, 0, 1, 1], [], []>} : vector<2x32xf32>, vector<32x128xf32>, vector<2x128xf32> -> vector<2x128xf32>
    %73 = arith.addf %71, %72 : vector<2x128xf32>
    %74 = math.tanh %73 : vector<2x128xf32>
    %75 = arith.negf %73 : vector<2x128xf32>
    %76 = math.exp %75 : vector<2x128xf32>
    %cst_32 = arith.constant 1.000000e+00 : f32
    %77 = vector.broadcast %cst_32 : f32 to vector<2x128xf32>
    %78 = arith.addf %77, %76 : vector<2x128xf32>
    %79 = arith.divf %77, %78 : vector<2x128xf32>
    %80 = arith.select %20, %74, %79 : vector<2x128xi1>, vector<2x128xf32>
    %81 = vector.extract_strided_slice %80 {offsets = [0, 0], sizes = [2, 32], strides = [1, 1]} : vector<2x128xf32> to vector<2x32xf32>
    %82 = vector.extract_strided_slice %80 {offsets = [0, 32], sizes = [2, 32], strides = [1, 1]} : vector<2x128xf32> to vector<2x32xf32>
    %83 = vector.extract_strided_slice %80 {offsets = [0, 64], sizes = [2, 32], strides = [1, 1]} : vector<2x128xf32> to vector<2x32xf32>
    %84 = vector.extract_strided_slice %80 {offsets = [0, 96], sizes = [2, 32], strides = [1, 1]} : vector<2x128xf32> to vector<2x32xf32>
    %85 = arith.mulf %82, %64 : vector<2x32xf32>
    %86 = arith.mulf %81, %83 : vector<2x32xf32>
    %87 = arith.addf %85, %86 : vector<2x32xf32>
    %88 = math.tanh %87 : vector<2x32xf32>
    %89 = arith.mulf %84, %88 : vector<2x32xf32>
    %90 = arith.index_cast %69 : i32 to index
    %c0_33 = arith.constant 0 : index
    %91 = vector.load %arg14[%90, %c0_33] : memref<16x32xf32, #tpu.memory_space<vmem>>, vector<2x32xf32>
    tpu.vector_store %arg14[%90, %c0_33], %89 {strides = array<i32>} : memref<16x32xf32, #tpu.memory_space<vmem>>, vector<2x32xf32>,
    %c3_i32 = arith.constant 3 : i32
    %c2_i32_34 = arith.constant 2 : i32
    %92 = arith.muli %c3_i32, %c2_i32_34 : i32
    %93 = arith.index_cast %92 : i32 to index
    %c0_35 = arith.constant 0 : index
    %94 = vector.load %arg13[%93, %c0_35] : memref<16x128xf32, #tpu.memory_space<vmem>>, vector<2x128xf32>
    %cst_36 = arith.constant dense<0.000000e+00> : vector<2x128xf32>
    %95 = tpu.matmul %89, %14, %cst_36 {dimension_numbers = #tpu.dot_dimension_numbers<[1], [0], [0], [1], [0, 0, 1, 1], [], []>} : vector<2x32xf32>, vector<32x128xf32>, vector<2x128xf32> -> vector<2x128xf32>
    %96 = arith.addf %94, %95 : vector<2x128xf32>
    %97 = math.tanh %96 : vector<2x128xf32>
    %98 = arith.negf %96 : vector<2x128xf32>
    %99 = math.exp %98 : vector<2x128xf32>
    %cst_37 = arith.constant 1.000000e+00 : f32
    %100 = vector.broadcast %cst_37 : f32 to vector<2x128xf32>
    %101 = arith.addf %100, %99 : vector<2x128xf32>
    %102 = arith.divf %100, %101 : vector<2x128xf32>
    %103 = arith.select %20, %97, %102 : vector<2x128xi1>, vector<2x128xf32>
    %104 = vector.extract_strided_slice %103 {offsets = [0, 0], sizes = [2, 32], strides = [1, 1]} : vector<2x128xf32> to vector<2x32xf32>
    %105 = vector.extract_strided_slice %103 {offsets = [0, 32], sizes = [2, 32], strides = [1, 1]} : vector<2x128xf32> to vector<2x32xf32>
    %106 = vector.extract_strided_slice %103 {offsets = [0, 64], sizes = [2, 32], strides = [1, 1]} : vector<2x128xf32> to vector<2x32xf32>
    %107 = vector.extract_strided_slice %103 {offsets = [0, 96], sizes = [2, 32], strides = [1, 1]} : vector<2x128xf32> to vector<2x32xf32>
    %108 = arith.mulf %105, %87 : vector<2x32xf32>
    %109 = arith.mulf %104, %106 : vector<2x32xf32>
    %110 = arith.addf %108, %109 : vector<2x32xf32>
    %111 = math.tanh %110 : vector<2x32xf32>
    %112 = arith.mulf %107, %111 : vector<2x32xf32>
    %113 = arith.index_cast %92 : i32 to index
    %c0_38 = arith.constant 0 : index
    %114 = vector.load %arg14[%113, %c0_38] : memref<16x32xf32, #tpu.memory_space<vmem>>, vector<2x32xf32>
    tpu.vector_store %arg14[%113, %c0_38], %112 {strides = array<i32>} : memref<16x32xf32, #tpu.memory_space<vmem>>, vector<2x32xf32>,
    %c4_i32 = arith.constant 4 : i32
    %c2_i32_39 = arith.constant 2 : i32
    %115 = arith.muli %c4_i32, %c2_i32_39 : i32
    %116 = arith.index_cast %115 : i32 to index
    %c0_40 = arith.constant 0 : index
    %117 = vector.load %arg13[%116, %c0_40] : memref<16x128xf32, #tpu.memory_space<vmem>>, vector<2x128xf32>
    %cst_41 = arith.constant dense<0.000000e+00> : vector<2x128xf32>
    %118 = tpu.matmul %112, %14, %cst_41 {dimension_numbers = #tpu.dot_dimension_numbers<[1], [0], [0], [1], [0, 0, 1, 1], [], []>} : vector<2x32xf32>, vector<32x128xf32>, vector<2x128xf32> -> vector<2x128xf32>
    %119 = arith.addf %117, %118 : vector<2x128xf32>
    %120 = math.tanh %119 : vector<2x128xf32>
    %121 = arith.negf %119 : vector<2x128xf32>
    %122 = math.exp %121 : vector<2x128xf32>
    %cst_42 = arith.constant 1.000000e+00 : f32
    %123 = vector.broadcast %cst_42 : f32 to vector<2x128xf32>
    %124 = arith.addf %123, %122 : vector<2x128xf32>
    %125 = arith.divf %123, %124 : vector<2x128xf32>
    %126 = arith.select %20, %120, %125 : vector<2x128xi1>, vector<2x128xf32>
    %127 = vector.extract_strided_slice %126 {offsets = [0, 0], sizes = [2, 32], strides = [1, 1]} : vector<2x128xf32> to vector<2x32xf32>
    %128 = vector.extract_strided_slice %126 {offsets = [0, 32], sizes = [2, 32], strides = [1, 1]} : vector<2x128xf32> to vector<2x32xf32>
    %129 = vector.extract_strided_slice %126 {offsets = [0, 64], sizes = [2, 32], strides = [1, 1]} : vector<2x128xf32> to vector<2x32xf32>
    %130 = vector.extract_strided_slice %126 {offsets = [0, 96], sizes = [2, 32], strides = [1, 1]} : vector<2x128xf32> to vector<2x32xf32>
    %131 = arith.mulf %128, %110 : vector<2x32xf32>
    %132 = arith.mulf %127, %129 : vector<2x32xf32>
    %133 = arith.addf %131, %132 : vector<2x32xf32>
    %134 = math.tanh %133 : vector<2x32xf32>
    %135 = arith.mulf %130, %134 : vector<2x32xf32>
    %136 = arith.index_cast %115 : i32 to index
    %c0_43 = arith.constant 0 : index
    %137 = vector.load %arg14[%136, %c0_43] : memref<16x32xf32, #tpu.memory_space<vmem>>, vector<2x32xf32>
    tpu.vector_store %arg14[%136, %c0_43], %135 {strides = array<i32>} : memref<16x32xf32, #tpu.memory_space<vmem>>, vector<2x32xf32>,
    %c5_i32 = arith.constant 5 : i32
    %c2_i32_44 = arith.constant 2 : i32
    %138 = arith.muli %c5_i32, %c2_i32_44 : i32
    %139 = arith.index_cast %138 : i32 to index
    %c0_45 = arith.constant 0 : index
    %140 = vector.load %arg13[%139, %c0_45] : memref<16x128xf32, #tpu.memory_space<vmem>>, vector<2x128xf32>
    %cst_46 = arith.constant dense<0.000000e+00> : vector<2x128xf32>
    %141 = tpu.matmul %135, %14, %cst_46 {dimension_numbers = #tpu.dot_dimension_numbers<[1], [0], [0], [1], [0, 0, 1, 1], [], []>} : vector<2x32xf32>, vector<32x128xf32>, vector<2x128xf32> -> vector<2x128xf32>
    %142 = arith.addf %140, %141 : vector<2x128xf32>
    %143 = math.tanh %142 : vector<2x128xf32>
    %144 = arith.negf %142 : vector<2x128xf32>
    %145 = math.exp %144 : vector<2x128xf32>
    %cst_47 = arith.constant 1.000000e+00 : f32
    %146 = vector.broadcast %cst_47 : f32 to vector<2x128xf32>
    %147 = arith.addf %146, %145 : vector<2x128xf32>
    %148 = arith.divf %146, %147 : vector<2x128xf32>
    %149 = arith.select %20, %143, %148 : vector<2x128xi1>, vector<2x128xf32>
    %150 = vector.extract_strided_slice %149 {offsets = [0, 0], sizes = [2, 32], strides = [1, 1]} : vector<2x128xf32> to vector<2x32xf32>
    %151 = vector.extract_strided_slice %149 {offsets = [0, 32], sizes = [2, 32], strides = [1, 1]} : vector<2x128xf32> to vector<2x32xf32>
    %152 = vector.extract_strided_slice %149 {offsets = [0, 64], sizes = [2, 32], strides = [1, 1]} : vector<2x128xf32> to vector<2x32xf32>
    %153 = vector.extract_strided_slice %149 {offsets = [0, 96], sizes = [2, 32], strides = [1, 1]} : vector<2x128xf32> to vector<2x32xf32>
    %154 = arith.mulf %151, %133 : vector<2x32xf32>
    %155 = arith.mulf %150, %152 : vector<2x32xf32>
    %156 = arith.addf %154, %155 : vector<2x32xf32>
    %157 = math.tanh %156 : vector<2x32xf32>
    %158 = arith.mulf %153, %157 : vector<2x32xf32>
    %159 = arith.index_cast %138 : i32 to index
    %c0_48 = arith.constant 0 : index
    %160 = vector.load %arg14[%159, %c0_48] : memref<16x32xf32, #tpu.memory_space<vmem>>, vector<2x32xf32>
    tpu.vector_store %arg14[%159, %c0_48], %158 {strides = array<i32>} : memref<16x32xf32, #tpu.memory_space<vmem>>, vector<2x32xf32>,
    %c6_i32 = arith.constant 6 : i32
    %c2_i32_49 = arith.constant 2 : i32
    %161 = arith.muli %c6_i32, %c2_i32_49 : i32
    %162 = arith.index_cast %161 : i32 to index
    %c0_50 = arith.constant 0 : index
    %163 = vector.load %arg13[%162, %c0_50] : memref<16x128xf32, #tpu.memory_space<vmem>>, vector<2x128xf32>
    %cst_51 = arith.constant dense<0.000000e+00> : vector<2x128xf32>
    %164 = tpu.matmul %158, %14, %cst_51 {dimension_numbers = #tpu.dot_dimension_numbers<[1], [0], [0], [1], [0, 0, 1, 1], [], []>} : vector<2x32xf32>, vector<32x128xf32>, vector<2x128xf32> -> vector<2x128xf32>
    %165 = arith.addf %163, %164 : vector<2x128xf32>
    %166 = math.tanh %165 : vector<2x128xf32>
    %167 = arith.negf %165 : vector<2x128xf32>
    %168 = math.exp %167 : vector<2x128xf32>
    %cst_52 = arith.constant 1.000000e+00 : f32
    %169 = vector.broadcast %cst_52 : f32 to vector<2x128xf32>
    %170 = arith.addf %169, %168 : vector<2x128xf32>
    %171 = arith.divf %169, %170 : vector<2x128xf32>
    %172 = arith.select %20, %166, %171 : vector<2x128xi1>, vector<2x128xf32>
    %173 = vector.extract_strided_slice %172 {offsets = [0, 0], sizes = [2, 32], strides = [1, 1]} : vector<2x128xf32> to vector<2x32xf32>
    %174 = vector.extract_strided_slice %172 {offsets = [0, 32], sizes = [2, 32], strides = [1, 1]} : vector<2x128xf32> to vector<2x32xf32>
    %175 = vector.extract_strided_slice %172 {offsets = [0, 64], sizes = [2, 32], strides = [1, 1]} : vector<2x128xf32> to vector<2x32xf32>
    %176 = vector.extract_strided_slice %172 {offsets = [0, 96], sizes = [2, 32], strides = [1, 1]} : vector<2x128xf32> to vector<2x32xf32>
    %177 = arith.mulf %174, %156 : vector<2x32xf32>
    %178 = arith.mulf %173, %175 : vector<2x32xf32>
    %179 = arith.addf %177, %178 : vector<2x32xf32>
    %180 = math.tanh %179 : vector<2x32xf32>
    %181 = arith.mulf %176, %180 : vector<2x32xf32>
    %182 = arith.index_cast %161 : i32 to index
    %c0_53 = arith.constant 0 : index
    %183 = vector.load %arg14[%182, %c0_53] : memref<16x32xf32, #tpu.memory_space<vmem>>, vector<2x32xf32>
    tpu.vector_store %arg14[%182, %c0_53], %181 {strides = array<i32>} : memref<16x32xf32, #tpu.memory_space<vmem>>, vector<2x32xf32>,
    %c7_i32 = arith.constant 7 : i32
    %c2_i32_54 = arith.constant 2 : i32
    %184 = arith.muli %c7_i32, %c2_i32_54 : i32
    %185 = arith.index_cast %184 : i32 to index
    %c0_55 = arith.constant 0 : index
    %186 = vector.load %arg13[%185, %c0_55] : memref<16x128xf32, #tpu.memory_space<vmem>>, vector<2x128xf32>
    %cst_56 = arith.constant dense<0.000000e+00> : vector<2x128xf32>
    %187 = tpu.matmul %181, %14, %cst_56 {dimension_numbers = #tpu.dot_dimension_numbers<[1], [0], [0], [1], [0, 0, 1, 1], [], []>} : vector<2x32xf32>, vector<32x128xf32>, vector<2x128xf32> -> vector<2x128xf32>
    %188 = arith.addf %186, %187 : vector<2x128xf32>
    %189 = math.tanh %188 : vector<2x128xf32>
    %190 = arith.negf %188 : vector<2x128xf32>
    %191 = math.exp %190 : vector<2x128xf32>
    %cst_57 = arith.constant 1.000000e+00 : f32
    %192 = vector.broadcast %cst_57 : f32 to vector<2x128xf32>
    %193 = arith.addf %192, %191 : vector<2x128xf32>
    %194 = arith.divf %192, %193 : vector<2x128xf32>
    %195 = arith.select %20, %189, %194 : vector<2x128xi1>, vector<2x128xf32>
    %196 = vector.extract_strided_slice %195 {offsets = [0, 0], sizes = [2, 32], strides = [1, 1]} : vector<2x128xf32> to vector<2x32xf32>
    %197 = vector.extract_strided_slice %195 {offsets = [0, 32], sizes = [2, 32], strides = [1, 1]} : vector<2x128xf32> to vector<2x32xf32>
    %198 = vector.extract_strided_slice %195 {offsets = [0, 64], sizes = [2, 32], strides = [1, 1]} : vector<2x128xf32> to vector<2x32xf32>
    %199 = vector.extract_strided_slice %195 {offsets = [0, 96], sizes = [2, 32], strides = [1, 1]} : vector<2x128xf32> to vector<2x32xf32>
    %200 = arith.mulf %197, %179 : vector<2x32xf32>
    %201 = arith.mulf %196, %198 : vector<2x32xf32>
    %202 = arith.addf %200, %201 : vector<2x32xf32>
    %203 = math.tanh %202 : vector<2x32xf32>
    %204 = arith.mulf %199, %203 : vector<2x32xf32>
    %205 = arith.index_cast %184 : i32 to index
    %c0_58 = arith.constant 0 : index
    %206 = vector.load %arg14[%205, %c0_58] : memref<16x32xf32, #tpu.memory_space<vmem>>, vector<2x32xf32>
    tpu.vector_store %arg14[%205, %c0_58], %204 {strides = array<i32>} : memref<16x32xf32, #tpu.memory_space<vmem>>, vector<2x32xf32>,
    %c8_i32 = arith.constant 8 : i32
    %c0_59 = arith.constant 0 : index
    %c0_60 = arith.constant 0 : index
    %207 = vector.load %arg14[%c0_59, %c0_60] : memref<16x32xf32, #tpu.memory_space<vmem>>, vector<16x32xf32>
    %c0_61 = arith.constant 0 : index
    %c0_62 = arith.constant 0 : index
    %208 = vector.load %arg8[%c0_61, %c0_62] : memref<32x4xf32, #tpu.memory_space<vmem>>, vector<32x4xf32>
    %cst_63 = arith.constant dense<0.000000e+00> : vector<16x4xf32>
    %209 = tpu.matmul %207, %208, %cst_63 {dimension_numbers = #tpu.dot_dimension_numbers<[1], [0], [0], [1], [0, 0, 1, 1], [], []>} : vector<16x32xf32>, vector<32x4xf32>, vector<16x4xf32> -> vector<16x4xf32>
    %c0_64 = arith.constant 0 : index
    %c0_65 = arith.constant 0 : index
    %210 = vector.load %arg9[%c0_64, %c0_65] : memref<1x4xf32, #tpu.memory_space<vmem>>, vector<1x4xf32>
    %211 = vector.broadcast %210 : vector<1x4xf32> to vector<16x4xf32>
    %212 = arith.addf %209, %211 : vector<16x4xf32>
    %c0_66 = arith.constant 0 : index
    %c0_67 = arith.constant 0 : index
    %213 = vector.load %arg10[%c0_66, %c0_67] : memref<16x4xf32, #tpu.memory_space<vmem>>, vector<16x4xf32>
    tpu.vector_store %arg10[%c0_66, %c0_67], %212 {strides = array<i32>} : memref<16x4xf32, #tpu.memory_space<vmem>>, vector<16x4xf32>,
    %c0_68 = arith.constant 0 : index
    %c0_69 = arith.constant 0 : index
    %214 = vector.load %arg11[%c0_68, %c0_69] : memref<2x32xf32, #tpu.memory_space<vmem>>, vector<2x32xf32>
    tpu.vector_store %arg11[%c0_68, %c0_69], %204 {strides = array<i32>} : memref<2x32xf32, #tpu.memory_space<vmem>>, vector<2x32xf32>,
    %c0_70 = arith.constant 0 : index
    %c0_71 = arith.constant 0 : index
    %215 = vector.load %arg12[%c0_70, %c0_71] : memref<2x32xf32, #tpu.memory_space<vmem>>, vector<2x32xf32>
    tpu.vector_store %arg12[%c0_70, %c0_71], %202 {strides = array<i32>} : memref<2x32xf32, #tpu.memory_space<vmem>>, vector<2x32xf32>,
    return
  }
}

</mosaic_0001>

<llo_original>
// kernel: q_network_forward.1
$region0: #{q_network_forward.1}
  #allocation0 [shape = 'u32[]', space=smem, size = 0x4, offset = 0x4, fixed_abs, tag = 'smem constant byte address 0x4 - core index']
  #allocation1 [shape = 'u32[144,128]{1,0:T(1,128)}', space=vmem, size = 0x12000, scoped, tag = 'internal scratch']
  #allocation2 [shape = 'f32[16,128]{1,0:T(8,128)}', space=vmem, size = 0x2000, scoped, tag = 'scratch operand']
  #allocation3 [shape = 'f32[16,32]{1,0:T(8,128)}', space=vmem, size = 0x2000, scoped, tag = 'scratch operand']
  %s0 = inlined_call_operand.vmem [shape: f32[16,16], index: 0, kind: input, shape index: {}]
  %s1 = inlined_call_operand.vmem [shape: f32[2,32], index: 1, kind: input, shape index: {}]
  %s2 = inlined_call_operand.vmem [shape: f32[2,32], index: 2, kind: input, shape index: {}]
  %s3 = inlined_call_operand.vmem [shape: f32[16,32], index: 3, kind: input, shape index: {}]
  %s4 = inlined_call_operand.vmem [shape: f32[1,32], index: 4, kind: input, shape index: {}]
  %s5 = inlined_call_operand.vmem [shape: f32[32,128], index: 5, kind: input, shape index: {}]
  %s6 = inlined_call_operand.vmem [shape: f32[1,128], index: 6, kind: input, shape index: {}]
  %s7 = inlined_call_operand.vmem [shape: f32[32,128], index: 7, kind: input, shape index: {}]
  %s8 = inlined_call_operand.vmem [shape: f32[32,4], index: 8, kind: input, shape index: {}]
  %s9 = inlined_call_operand.vmem [shape: f32[1,4], index: 9, kind: input, shape index: {}]
  %s10 = inlined_call_operand.vmem [shape: f32[16,4], index: 10, kind: output, shape index: {0}]
  %s11 = inlined_call_operand.hbm [shape: f32[2,32], index: 11, kind: output, shape index: {1}]
  %s12 = inlined_call_operand.hbm [shape: f32[2,32], index: 12, kind: output, shape index: {2}]
  %13 = xla_tuple %s10, %s11, %s12
  %s14 = sld [smem:[#allocation0]]
  $region66: #{q_network_forward.1} parent=0
    _
  %s16 = ssub.s32 1, %s14
  %s17 = scalar_select 0, %s16, %s14
  $region1: #{q_network_forward.1} parent=0
    #allocation4 [shape = 'u8[1024]{0}', space=vmem, size = 0x400, scoped, tag = 'output window, operand 1, single buffered']
    #allocation5 [shape = 's32[1]{0}', space=sflag, size = 0x4, scoped, tag = 'scoped memory for q_network_forward.1']
    #allocation6 [shape = 'u8[1024]{0}', space=vmem, size = 0x400, scoped, tag = 'output window, operand 2, single buffered']
    #allocation7 [shape = 's32[1]{0}', space=sflag, size = 0x4, scoped, tag = 'scoped memory for q_network_forward.1']
    %18 = vsyncpa [#allocation5], 0
    %19 = vsyncpa [#allocation7], 0
    // Predicated region
    $region2: #{q_network_forward.1} parent=1 // pred_check
      _
    $region3: #{q_network_forward.1} parent=1 // pred_check_branch
      %21 = sbr.rel (0) target = $region5
    $region4: #{q_network_forward.1} parent=1 // pred_region
      _
    $region5: #{q_network_forward.1} parent=1 // pred_fallthru
      _
    // Predicated region
    $region6: #{q_network_forward.1} parent=1 // pred_check
      _
    $region7: #{q_network_forward.1} parent=1 // pred_check_branch
      %23 = sbr.rel (0) target = $region9
    $region8: #{q_network_forward.1} parent=1 // pred_region
      _
    $region9: #{q_network_forward.1} parent=1 // pred_fallthru
      _
    // Predicated region
    $region10: #{q_network_forward.1} parent=1 // pred_check
      _
    $region11: #{q_network_forward.1} parent=1 // pred_check_branch
      %25 = sbr.rel (0) target = $region13
    $region12: #{q_network_forward.1} parent=1 // pred_region
      _
    $region13: #{q_network_forward.1} parent=1 // pred_fallthru
      _
    // Predicated region
    $region14: #{q_network_forward.1} parent=1 // pred_check
      _
    $region15: #{q_network_forward.1} parent=1 // pred_check_branch
      %27 = sbr.rel (0) target = $region17
    $region16: #{q_network_forward.1} parent=1 // pred_region
      _
    $region17: #{q_network_forward.1} parent=1 // pred_fallthru
      _
    // Predicated region
    $region18: #{q_network_forward.1} parent=1 // pred_check
      _
    $region19: #{q_network_forward.1} parent=1 // pred_check_branch
      %29 = sbr.rel (0) target = $region21
    $region20: #{q_network_forward.1} parent=1 // pred_region
      _
    $region21: #{q_network_forward.1} parent=1 // pred_fallthru
      _
    // Predicated region
    $region22: #{q_network_forward.1} parent=1 // pred_check
      _
    $region23: #{q_network_forward.1} parent=1 // pred_check_branch
      %31 = sbr.rel (0) target = $region25
    $region24: #{q_network_forward.1} parent=1 // pred_region
      _
    $region25: #{q_network_forward.1} parent=1 // pred_fallthru
      _
    // Predicated region
    $region26: #{q_network_forward.1} parent=1 // pred_check
      _
    $region27: #{q_network_forward.1} parent=1 // pred_check_branch
      %33 = sbr.rel (0) target = $region29
    $region28: #{q_network_forward.1} parent=1 // pred_region
      _
    $region29: #{q_network_forward.1} parent=1 // pred_fallthru
      _
    // Predicated region
    $region30: #{q_network_forward.1} parent=1 // pred_check
      _
    $region31: #{q_network_forward.1} parent=1 // pred_check_branch
      %35 = sbr.rel (0) target = $region33
    $region32: #{q_network_forward.1} parent=1 // pred_region
      _
    $region33: #{q_network_forward.1} parent=1 // pred_fallthru
      _
    // Predicated region
    $region34: #{q_network_forward.1} parent=1 // pred_check
      _
    $region35: #{q_network_forward.1} parent=1 // pred_check_branch
      %37 = sbr.rel (0) target = $region37
    $region36: #{q_network_forward.1} parent=1 // pred_region
      _
    $region37: #{q_network_forward.1} parent=1 // pred_fallthru
      _
    // Predicated region
    $region38: #{q_network_forward.1} parent=1 // pred_check
      _
    $region39: #{q_network_forward.1} parent=1 // pred_check_branch
      %39 = sbr.rel (0) target = $region41
    $region40: #{q_network_forward.1} parent=1 // pred_region
      _
    $region41: #{q_network_forward.1} parent=1 // pred_fallthru
      _
    %v40 = vld [vmem:[%s0] sm:$0xff]
    %v41 = vld [vmem:[%s0 + $0x8] sm:$0xff]
    %v42 = vld [vmem:[%s3] sm:$0xff]
    %v43 = vld [vmem:[%s3 + $0x8] sm:$0xff]
    %v44 = vld [vmem:[%s4] sm:$0x1]
    %v46 = vlaneseq
    %v47 = vshrl.u32 %v46, 7
    %v48 = vsub.s32 0, %v47
    %v49 = vrot.slane %v44, %v48
    %vm51 = vcmask 130048
    %v53 = vsel %vm51, %v40, 0
    %v56 = vsel %vm51, %v41, 0
    %58 = vmatprep.subr.mxu0 0.0
    %59 = vmatpush1.msra.mxu0 %v42
    %60 = vmatprep.subr.mxu0 0.0
    %61 = vmatpush1.msra.mxu0 %v43
    %62 = vmatprep.subr.mxu0 0.0
    %63 = vmatpush1.msra.mxu0 0.0
    %64 = vmatprep.subr.mxu0 0.0
    %65 = vmatpush1.msra.mxu0 0.0
    %66 = vmatprep.subr.mxu0 0.0
    %67 = vmatpush1.msra.mxu0 0.0
    %68 = vmatprep.subr.mxu0 0.0
    %69 = vmatpush1.msra.mxu0 0.0
    %70 = vmatprep.subr.mxu0 0.0
    %71 = vmatpush1.msra.mxu0 0.0
    %72 = vmatprep.subr.mxu0 0.0
    %73 = vmatpush1.msra.mxu0 0.0
    %74 = vmatprep.subr.mxu0 0.0
    %75 = vmatpush1.msra.mxu0 0.0
    %76 = vmatprep.subr.mxu0 0.0
    %77 = vmatpush1.msra.mxu0 0.0
    %78 = vmatprep.subr.mxu0 0.0
    %79 = vmatpush1.msra.mxu0 0.0
    %80 = vmatprep.subr.mxu0 0.0
    %81 = vmatpush1.msra.mxu0 0.0
    %82 = vmatprep.subr.mxu0 0.0
    %83 = vmatpush1.msra.mxu0 0.0
    %84 = vmatprep.subr.mxu0 0.0
    %85 = vmatpush1.msra.mxu0 0.0
    %86 = vmatprep.subr.mxu0 0.0
    %87 = vmatpush1.msra.mxu0 0.0
    %88 = vmatprep.subr.mxu0 0.0
    %89 = vmatpush1.msra.mxu0 0.0
    %90 = vmatprep.subr.mxu0 0.0
    %91 = vmatpush1.msra.mxu0 0.0
    %92 = vmatprep.subr.mxu0 0.0
    %93 = vmatpush1.msra.mxu0 0.0
    %94 = vmatprep.subr.mxu0 0.0
    %95 = vmatpush1.msra.mxu0 0.0
    %96 = vmatprep.subr.mxu0 0.0
    %97 = vmatpush1.msra.mxu0 0.0
    %98 = vmatprep.subr.mxu0 0.0
    %99 = vmatpush1.msra.mxu0 0.0
    %100 = vmatprep.subr.mxu0 0.0
    %101 = vmatpush1.msra.mxu0 0.0
    %102 = vmatprep.subr.mxu0 0.0
    %103 = vmatpush1.msra.mxu0 0.0
    %104 = vmatprep.subr.mxu0 0.0
    %105 = vmatpush1.msra.mxu0 0.0
    %106 = vmatprep.subr.mxu0 0.0
    %107 = vmatpush1.msra.mxu0 0.0
    %108 = vmatprep.subr.mxu0 0.0
    %109 = vmatpush1.msra.mxu0 0.0
    %110 = vmatprep.subr.mxu0 0.0
    %111 = vmatpush1.msra.mxu0 0.0
    %112 = vmatprep.subr.mxu0 0.0
    %113 = vmatpush1.msra.mxu0 0.0
    %114 = vmatprep.subr.mxu0 0.0
    %115 = vmatpush1.msra.mxu0 0.0
    %116 = vmatprep.subr.mxu0 0.0
    %117 = vmatpush1.msra.mxu0 0.0
    %118 = vmatprep.subr.mxu0 0.0
    %119 = vmatpush1.msra.mxu0 0.0
    %120 = vmatprep.subr.mxu0 0.0
    %121 = vmatpush1.msra.mxu0 0.0
    %122 = vmatprep.mubr.f32.mxu0 0.0
    %123 = vmatmul.mubr.f32.gmra.mrb[0].mxu0 %v53
    %v124 = vpop.f32.mrb[0].mxu0
    %v125 = vadd.f32 %v49, %v124
    %v126 = vpop.f32.mrb[0].mxu0
    %127 = vmatprep.mubr.f32.mxu0 0.0
    %128 = vmatmul.mubr.f32.gmra.mrb[0].mxu0 %v56
    %v129 = vpop.f32.mrb[0].mxu0
    %v130 = vadd.f32 %v49, %v129
    %v131 = vpop.f32.mrb[0].mxu0
    %132 = vdwg.mxu0
    %v133 = vmax.f32 %v125, 0.0
    %v134 = vmax.f32 %v130, 0.0
    %v135 = vld [vmem:[%s5] sm:$0xff]
    %v136 = vld [vmem:[%s5 + $0x8] sm:$0xff]
    %v137 = vld [vmem:[%s5 + $0x10] sm:$0xff]
    %v138 = vld [vmem:[%s5 + $0x18] sm:$0xff]
    %v139 = vld [vmem:[%s6] sm:$0x1]
    %v141 = vlaneseq
    %v142 = vshrl.u32 %v141, 7
    %v143 = vsub.s32 0, %v142
    %v144 = vrot.slane %v139, %v143
    %vm146 = vcmask 261120
    %v148 = vsel %vm146, %v133, 0
    %v151 = vsel %vm146, %v134, 0
    %153 = vmatprep.subr.mxu0 0.0
    %154 = vmatpush1.msra.mxu0 %v135
    %155 = vmatprep.subr.mxu0 0.0
    %156 = vmatpush1.msra.mxu0 %v136
    %157 = vmatprep.subr.mxu0 0.0
    %158 = vmatpush1.msra.mxu0 %v137
    %159 = vmatprep.subr.mxu0 0.0
    %160 = vmatpush1.msra.mxu0 %v138
    %161 = vmatprep.subr.mxu0 0.0
    %162 = vmatpush1.msra.mxu0 0.0
    %163 = vmatprep.subr.mxu0 0.0
    %164 = vmatpush1.msra.mxu0 0.0
    %165 = vmatprep.subr.mxu0 0.0
    %166 = vmatpush1.msra.mxu0 0.0
    %167 = vmatprep.subr.mxu0 0.0
    %168 = vmatpush1.msra.mxu0 0.0
    %169 = vmatprep.subr.mxu0 0.0
    %170 = vmatpush1.msra.mxu0 0.0
    %171 = vmatprep.subr.mxu0 0.0
    %172 = vmatpush1.msra.mxu0 0.0
    %173 = vmatprep.subr.mxu0 0.0
    %174 = vmatpush1.msra.mxu0 0.0
    %175 = vmatprep.subr.mxu0 0.0
    %176 = vmatpush1.msra.mxu0 0.0
    %177 = vmatprep.subr.mxu0 0.0
    %178 = vmatpush1.msra.mxu0 0.0
    %179 = vmatprep.subr.mxu0 0.0
    %180 = vmatpush1.msra.mxu0 0.0
    %181 = vmatprep.subr.mxu0 0.0
    %182 = vmatpush1.msra.mxu0 0.0
    %183 = vmatprep.subr.mxu0 0.0
    %184 = vmatpush1.msra.mxu0 0.0
    %185 = vmatprep.subr.mxu0 0.0
    %186 = vmatpush1.msra.mxu0 0.0
    %187 = vmatprep.subr.mxu0 0.0
    %188 = vmatpush1.msra.mxu0 0.0
    %189 = vmatprep.subr.mxu0 0.0
    %190 = vmatpush1.msra.mxu0 0.0
    %191 = vmatprep.subr.mxu0 0.0
    %192 = vmatpush1.msra.mxu0 0.0
    %193 = vmatprep.subr.mxu0 0.0
    %194 = vmatpush1.msra.mxu0 0.0
    %195 = vmatprep.subr.mxu0 0.0
    %196 = vmatpush1.msra.mxu0 0.0
    %197 = vmatprep.subr.mxu0 0.0
    %198 = vmatpush1.msra.mxu0 0.0
    %199 = vmatprep.subr.mxu0 0.0
    %200 = vmatpush1.msra.mxu0 0.0
    %201 = vmatprep.subr.mxu0 0.0
    %202 = vmatpush1.msra.mxu0 0.0
    %203 = vmatprep.subr.mxu0 0.0
    %204 = vmatpush1.msra.mxu0 0.0
    %205 = vmatprep.subr.mxu0 0.0
    %206 = vmatpush1.msra.mxu0 0.0
    %207 = vmatprep.subr.mxu0 0.0
    %208 = vmatpush1.msra.mxu0 0.0
    %209 = vmatprep.subr.mxu0 0.0
    %210 = vmatpush1.msra.mxu0 0.0
    %211 = vmatprep.subr.mxu0 0.0
    %212 = vmatpush1.msra.mxu0 0.0
    %213 = vmatprep.subr.mxu0 0.0
    %214 = vmatpush1.msra.mxu0 0.0
    %215 = vmatprep.subr.mxu0 0.0
    %216 = vmatpush1.msra.mxu0 0.0
    %217 = vmatprep.mubr.f32.mxu0 0.0
    %218 = vmatmul.mubr.f32.gmra.mrb[0].mxu0 %v148
    %v219 = vpop.f32.mrb[0].mxu0
    %v220 = vadd.f32 %v144, %v219
    %v221 = vpop.f32.mrb[0].mxu0
    %222 = vmatprep.mubr.f32.mxu0 0.0
    %223 = vmatmul.mubr.f32.gmra.mrb[0].mxu0 %v151
    %v224 = vpop.f32.mrb[0].mxu0
    %v225 = vadd.f32 %v144, %v224
    %v226 = vpop.f32.mrb[0].mxu0
    %227 = vdwg.mxu0
    %228 = vst [vmem:[#allocation2] sm:$0xff] %v220
    %229 = vst [vmem:[#allocation2 + $0x8] sm:$0xff] %v225
    %v230 = vld [vmem:[%s7] sm:$0xff]
    %v231 = vld [vmem:[%s7 + $0x8] sm:$0xff]
    %v232 = vld [vmem:[%s7 + $0x10] sm:$0xff]
    %v233 = vld [vmem:[%s7 + $0x18] sm:$0xff]
    %v234 = vlaneseq
    %v235 = vand.u32 %v234, 127
    %vm236 = vcmp.ge.s32.totalorder %v235, 64
    %vm237 = vcmp.lt.s32.totalorder %v235, 96
    %vm238 = vmand %vm236, %vm237
    %v239 = vld [vmem:[%s1] sm:$0x3]
    %v240 = vld [vmem:[%s2] sm:$0x3]
    %v241 = vld [vmem:[#allocation2] sm:$0x3]
    %v243 = vsel %vm146, %v239, 0
    %245 = vmatprep.subr.mxu0 0.0
    %246 = vmatpush1.msra.mxu0 %v230
    %247 = vmatprep.subr.mxu0 0.0
    %248 = vmatpush1.msra.mxu0 %v231
    %249 = vmatprep.subr.mxu0 0.0
    %250 = vmatpush1.msra.mxu0 %v232
    %251 = vmatprep.subr.mxu0 0.0
    %252 = vmatpush1.msra.mxu0 %v233
    %253 = vmatprep.subr.mxu0 0.0
    %254 = vmatpush1.msra.mxu0 0.0
    %255 = vmatprep.subr.mxu0 0.0
    %256 = vmatpush1.msra.mxu0 0.0
    %257 = vmatprep.subr.mxu0 0.0
    %258 = vmatpush1.msra.mxu0 0.0
    %259 = vmatprep.subr.mxu0 0.0
    %260 = vmatpush1.msra.mxu0 0.0
    %261 = vmatprep.subr.mxu0 0.0
    %262 = vmatpush1.msra.mxu0 0.0
    %263 = vmatprep.subr.mxu0 0.0
    %264 = vmatpush1.msra.mxu0 0.0
    %265 = vmatprep.subr.mxu0 0.0
    %266 = vmatpush1.msra.mxu0 0.0
    %267 = vmatprep.subr.mxu0 0.0
    %268 = vmatpush1.msra.mxu0 0.0
    %269 = vmatprep.subr.mxu0 0.0
    %270 = vmatpush1.msra.mxu0 0.0
    %271 = vmatprep.subr.mxu0 0.0
    %272 = vmatpush1.msra.mxu0 0.0
    %273 = vmatprep.subr.mxu0 0.0
    %274 = vmatpush1.msra.mxu0 0.0
    %275 = vmatprep.subr.mxu0 0.0
    %276 = vmatpush1.msra.mxu0 0.0
    %277 = vmatprep.subr.mxu0 0.0
    %278 = vmatpush1.msra.mxu0 0.0
    %279 = vmatprep.subr.mxu0 0.0
    %280 = vmatpush1.msra.mxu0 0.0
    %281 = vmatprep.subr.mxu0 0.0
    %282 = vmatpush1.msra.mxu0 0.0
    %283 = vmatprep.subr.mxu0 0.0
    %284 = vmatpush1.msra.mxu0 0.0
    %285 = vmatprep.subr.mxu0 0.0
    %286 = vmatpush1.msra.mxu0 0.0
    %287 = vmatprep.subr.mxu0 0.0
    %288 = vmatpush1.msra.mxu0 0.0
    %289 = vmatprep.subr.mxu0 0.0
    %290 = vmatpush1.msra.mxu0 0.0
    %291 = vmatprep.subr.mxu0 0.0
    %292 = vmatpush1.msra.mxu0 0.0
    %293 = vmatprep.subr.mxu0 0.0
    %294 = vmatpush1.msra.mxu0 0.0
    %295 = vmatprep.subr.mxu0 0.0
    %296 = vmatpush1.msra.mxu0 0.0
    %297 = vmatprep.subr.mxu0 0.0
    %298 = vmatpush1.msra.mxu0 0.0
    %299 = vmatprep.subr.mxu0 0.0
    %300 = vmatpush1.msra.mxu0 0.0
    %301 = vmatprep.subr.mxu0 0.0
    %302 = vmatpush1.msra.mxu0 0.0
    %303 = vmatprep.subr.mxu0 0.0
    %304 = vmatpush1.msra.mxu0 0.0
    %305 = vmatprep.subr.mxu0 0.0
    %306 = vmatpush1.msra.mxu0 0.0
    %307 = vmatprep.subr.mxu0 0.0
    %308 = vmatpush1.msra.mxu0 0.0
    %309 = vmatprep.mubr.f32.mxu0 0.0
    %310 = vmatmul.mubr.f32.gmra.mrb[0].mxu0 %v243
    %v311 = vpop.f32.mrb[0].mxu0
    %v312 = vadd.f32 0.0, %v311
    %v313 = vpop.f32.mrb[0].mxu0
    %314 = vdwg.mxu0
    %v315 = vadd.f32 %v241, %v312
    %v316 = vtanh.pop %v315
    %v317 = vxor.u32 %v315, 2147483648
    %v318 = vmul.f32 %v317, 1.442695
    %v319 = vpow.pop %v318
    %v320 = vadd.f32 %v319, 1.0
    %v321 = vrcp.pop %v320
    %v322 = vmul.f32 1.0, %v321
    %v323 = vsel %vm238, %v316, %v322
    %325 = vrot.lane.b32.xlu0 %v240, 32
    %v326 = vpop.permute.xlu0 %325
    %v328 = vmul.f32 %v323, %v326
    %330 = vrot.lane.b32.xlu0 %v323, 64
    %v331 = vpop.permute.xlu0 %330
    %v333 = vmul.f32 %v323, %v331
    %335 = vrot.lane.b32.xlu0 %v333, 32
    %v336 = vpop.permute.xlu0 %335
    %v338 = vadd.f32 %v328, %v336
    %v339 = vtanh.pop %v338
    %341 = vrot.lane.b32.xlu0 %v339, 64
    %v342 = vpop.permute.xlu0 %341
    %v344 = vmul.f32 %v323, %v342
    %346 = vrot.lane.b32.xlu0 %v344, 32
    %v347 = vpop.permute.xlu0 %346
    %vm349 = vcmask 254976
    %350 = vst.msk [vmem:[#allocation3] sm:$0x3] %vm349, %v347
    %v351 = vld [vmem:[#allocation2 + $0x2] sm:$0x3]
    %v352 = vsel %vm146, %v347, 0
    %354 = vmatprep.subr.mxu0 0.0
    %355 = vmatpush1.msra.mxu0 %v230
    %356 = vmatprep.subr.mxu0 0.0
    %357 = vmatpush1.msra.mxu0 %v231
    %358 = vmatprep.subr.mxu0 0.0
    %359 = vmatpush1.msra.mxu0 %v232
    %360 = vmatprep.subr.mxu0 0.0
    %361 = vmatpush1.msra.mxu0 %v233
    %362 = vmatprep.subr.mxu0 0.0
    %363 = vmatpush1.msra.mxu0 0.0
    %364 = vmatprep.subr.mxu0 0.0
    %365 = vmatpush1.msra.mxu0 0.0
    %366 = vmatprep.subr.mxu0 0.0
    %367 = vmatpush1.msra.mxu0 0.0
    %368 = vmatprep.subr.mxu0 0.0
    %369 = vmatpush1.msra.mxu0 0.0
    %370 = vmatprep.subr.mxu0 0.0
    %371 = vmatpush1.msra.mxu0 0.0
    %372 = vmatprep.subr.mxu0 0.0
    %373 = vmatpush1.msra.mxu0 0.0
    %374 = vmatprep.subr.mxu0 0.0
    %375 = vmatpush1.msra.mxu0 0.0
    %376 = vmatprep.subr.mxu0 0.0
    %377 = vmatpush1.msra.mxu0 0.0
    %378 = vmatprep.subr.mxu0 0.0
    %379 = vmatpush1.msra.mxu0 0.0
    %380 = vmatprep.subr.mxu0 0.0
    %381 = vmatpush1.msra.mxu0 0.0
    %382 = vmatprep.subr.mxu0 0.0
    %383 = vmatpush1.msra.mxu0 0.0
    %384 = vmatprep.subr.mxu0 0.0
    %385 = vmatpush1.msra.mxu0 0.0
    %386 = vmatprep.subr.mxu0 0.0
    %387 = vmatpush1.msra.mxu0 0.0
    %388 = vmatprep.subr.mxu0 0.0
    %389 = vmatpush1.msra.mxu0 0.0
    %390 = vmatprep.subr.mxu0 0.0
    %391 = vmatpush1.msra.mxu0 0.0
    %392 = vmatprep.subr.mxu0 0.0
    %393 = vmatpush1.msra.mxu0 0.0
    %394 = vmatprep.subr.mxu0 0.0
    %395 = vmatpush1.msra.mxu0 0.0
    %396 = vmatprep.subr.mxu0 0.0
    %397 = vmatpush1.msra.mxu0 0.0
    %398 = vmatprep.subr.mxu0 0.0
    %399 = vmatpush1.msra.mxu0 0.0
    %400 = vmatprep.subr.mxu0 0.0
    %401 = vmatpush1.msra.mxu0 0.0
    %402 = vmatprep.subr.mxu0 0.0
    %403 = vmatpush1.msra.mxu0 0.0
    %404 = vmatprep.subr.mxu0 0.0
    %405 = vmatpush1.msra.mxu0 0.0
    %406 = vmatprep.subr.mxu0 0.0
    %407 = vmatpush1.msra.mxu0 0.0
    %408 = vmatprep.subr.mxu0 0.0
    %409 = vmatpush1.msra.mxu0 0.0
    %410 = vmatprep.subr.mxu0 0.0
    %411 = vmatpush1.msra.mxu0 0.0
    %412 = vmatprep.subr.mxu0 0.0
    %413 = vmatpush1.msra.mxu0 0.0
    %414 = vmatprep.subr.mxu0 0.0
    %415 = vmatpush1.msra.mxu0 0.0
    %416 = vmatprep.subr.mxu0 0.0
    %417 = vmatpush1.msra.mxu0 0.0
    %418 = vmatprep.mubr.f32.mxu0 0.0
    %419 = vmatmul.mubr.f32.gmra.mrb[0].mxu0 %v352
    %v420 = vpop.f32.mrb[0].mxu0
    %v421 = vadd.f32 0.0, %v420
    %v422 = vpop.f32.mrb[0].mxu0
    %423 = vdwg.mxu0
    %v424 = vadd.f32 %v351, %v421
    %v425 = vtanh.pop %v424
    %v426 = vxor.u32 %v424, 2147483648
    %v427 = vmul.f32 %v426, 1.442695
    %v428 = vpow.pop %v427
    %v429 = vadd.f32 %v428, 1.0
    %v430 = vrcp.pop %v429
    %v431 = vmul.f32 1.0, %v430
    %v432 = vsel %vm238, %v425, %v431
    %v433 = vmul.f32 %v432, %v338
    %435 = vrot.lane.b32.xlu0 %v432, 64
    %v436 = vpop.permute.xlu0 %435
    %v438 = vmul.f32 %v432, %v436
    %440 = vrot.lane.b32.xlu0 %v438, 32
    %v441 = vpop.permute.xlu0 %440
    %v443 = vadd.f32 %v433, %v441
    %v444 = vtanh.pop %v443
    %446 = vrot.lane.b32.xlu0 %v444, 64
    %v447 = vpop.permute.xlu0 %446
    %v449 = vmul.f32 %v432, %v447
    %451 = vrot.lane.b32.xlu0 %v449, 32
    %v452 = vpop.permute.xlu0 %451
    %454 = vst.msk [vmem:[#allocation3 + $0x2] sm:$0x3] %vm349, %v452
    %v455 = vld [vmem:[#allocation2 + $0x4] sm:$0x3]
    %v456 = vsel %vm146, %v452, 0
    %458 = vmatprep.subr.mxu0 0.0
    %459 = vmatpush1.msra.mxu0 %v230
    %460 = vmatprep.subr.mxu0 0.0
    %461 = vmatpush1.msra.mxu0 %v231
    %462 = vmatprep.subr.mxu0 0.0
    %463 = vmatpush1.msra.mxu0 %v232
    %464 = vmatprep.subr.mxu0 0.0
    %465 = vmatpush1.msra.mxu0 %v233
    %466 = vmatprep.subr.mxu0 0.0
    %467 = vmatpush1.msra.mxu0 0.0
    %468 = vmatprep.subr.mxu0 0.0
    %469 = vmatpush1.msra.mxu0 0.0
    %470 = vmatprep.subr.mxu0 0.0
    %471 = vmatpush1.msra.mxu0 0.0
    %472 = vmatprep.subr.mxu0 0.0
    %473 = vmatpush1.msra.mxu0 0.0
    %474 = vmatprep.subr.mxu0 0.0
    %475 = vmatpush1.msra.mxu0 0.0
    %476 = vmatprep.subr.mxu0 0.0
    %477 = vmatpush1.msra.mxu0 0.0
    %478 = vmatprep.subr.mxu0 0.0
    %479 = vmatpush1.msra.mxu0 0.0
    %480 = vmatprep.subr.mxu0 0.0
    %481 = vmatpush1.msra.mxu0 0.0
    %482 = vmatprep.subr.mxu0 0.0
    %483 = vmatpush1.msra.mxu0 0.0
    %484 = vmatprep.subr.mxu0 0.0
    %485 = vmatpush1.msra.mxu0 0.0
    %486 = vmatprep.subr.mxu0 0.0
    %487 = vmatpush1.msra.mxu0 0.0
    %488 = vmatprep.subr.mxu0 0.0
    %489 = vmatpush1.msra.mxu0 0.0
    %490 = vmatprep.subr.mxu0 0.0
    %491 = vmatpush1.msra.mxu0 0.0
    %492 = vmatprep.subr.mxu0 0.0
    %493 = vmatpush1.msra.mxu0 0.0
    %494 = vmatprep.subr.mxu0 0.0
    %495 = vmatpush1.msra.mxu0 0.0
    %496 = vmatprep.subr.mxu0 0.0
    %497 = vmatpush1.msra.mxu0 0.0
    %498 = vmatprep.subr.mxu0 0.0
    %499 = vmatpush1.msra.mxu0 0.0
    %500 = vmatprep.subr.mxu0 0.0
    %501 = vmatpush1.msra.mxu0 0.0
    %502 = vmatprep.subr.mxu0 0.0
    %503 = vmatpush1.msra.mxu0 0.0
    %504 = vmatprep.subr.mxu0 0.0
    %505 = vmatpush1.msra.mxu0 0.0
    %506 = vmatprep.subr.mxu0 0.0
    %507 = vmatpush1.msra.mxu0 0.0
    %508 = vmatprep.subr.mxu0 0.0
    %509 = vmatpush1.msra.mxu0 0.0
    %510 = vmatprep.subr.mxu0 0.0
    %511 = vmatpush1.msra.mxu0 0.0
    %512 = vmatprep.subr.mxu0 0.0
    %513 = vmatpush1.msra.mxu0 0.0
    %514 = vmatprep.subr.mxu0 0.0
    %515 = vmatpush1.msra.mxu0 0.0
    %516 = vmatprep.subr.mxu0 0.0
    %517 = vmatpush1.msra.mxu0 0.0
    %518 = vmatprep.subr.mxu0 0.0
    %519 = vmatpush1.msra.mxu0 0.0
    %520 = vmatprep.subr.mxu0 0.0
    %521 = vmatpush1.msra.mxu0 0.0
    %522 = vmatprep.mubr.f32.mxu0 0.0
    %523 = vmatmul.mubr.f32.gmra.mrb[0].mxu0 %v456
    %v524 = vpop.f32.mrb[0].mxu0
    %v525 = vadd.f32 0.0, %v524
    %v526 = vpop.f32.mrb[0].mxu0
    %527 = vdwg.mxu0
    %v528 = vadd.f32 %v455, %v525
    %v529 = vtanh.pop %v528
    %v530 = vxor.u32 %v528, 2147483648
    %v531 = vmul.f32 %v530, 1.442695
    %v532 = vpow.pop %v531
    %v533 = vadd.f32 %v532, 1.0
    %v534 = vrcp.pop %v533
    %v535 = vmul.f32 1.0, %v534
    %v536 = vsel %vm238, %v529, %v535
    %v537 = vmul.f32 %v536, %v443
    %539 = vrot.lane.b32.xlu0 %v536, 64
    %v540 = vpop.permute.xlu0 %539
    %v542 = vmul.f32 %v536, %v540
    %544 = vrot.lane.b32.xlu0 %v542, 32
    %v545 = vpop.permute.xlu0 %544
    %v547 = vadd.f32 %v537, %v545
    %v548 = vtanh.pop %v547
    %550 = vrot.lane.b32.xlu0 %v548, 64
    %v551 = vpop.permute.xlu0 %550
    %v553 = vmul.f32 %v536, %v551
    %555 = vrot.lane.b32.xlu0 %v553, 32
    %v556 = vpop.permute.xlu0 %555
    %558 = vst.msk [vmem:[#allocation3 + $0x4] sm:$0x3] %vm349, %v556
    %v559 = vld [vmem:[#allocation2 + $0x6] sm:$0x3]
    %v560 = vsel %vm146, %v556, 0
    %562 = vmatprep.subr.mxu0 0.0
    %563 = vmatpush1.msra.mxu0 %v230
    %564 = vmatprep.subr.mxu0 0.0
    %565 = vmatpush1.msra.mxu0 %v231
    %566 = vmatprep.subr.mxu0 0.0
    %567 = vmatpush1.msra.mxu0 %v232
    %568 = vmatprep.subr.mxu0 0.0
    %569 = vmatpush1.msra.mxu0 %v233
    %570 = vmatprep.subr.mxu0 0.0
    %571 = vmatpush1.msra.mxu0 0.0
    %572 = vmatprep.subr.mxu0 0.0
    %573 = vmatpush1.msra.mxu0 0.0
    %574 = vmatprep.subr.mxu0 0.0
    %575 = vmatpush1.msra.mxu0 0.0
    %576 = vmatprep.subr.mxu0 0.0
    %577 = vmatpush1.msra.mxu0 0.0
    %578 = vmatprep.subr.mxu0 0.0
    %579 = vmatpush1.msra.mxu0 0.0
    %580 = vmatprep.subr.mxu0 0.0
    %581 = vmatpush1.msra.mxu0 0.0
    %582 = vmatprep.subr.mxu0 0.0
    %583 = vmatpush1.msra.mxu0 0.0
    %584 = vmatprep.subr.mxu0 0.0
    %585 = vmatpush1.msra.mxu0 0.0
    %586 = vmatprep.subr.mxu0 0.0
    %587 = vmatpush1.msra.mxu0 0.0
    %588 = vmatprep.subr.mxu0 0.0
    %589 = vmatpush1.msra.mxu0 0.0
    %590 = vmatprep.subr.mxu0 0.0
    %591 = vmatpush1.msra.mxu0 0.0
    %592 = vmatprep.subr.mxu0 0.0
    %593 = vmatpush1.msra.mxu0 0.0
    %594 = vmatprep.subr.mxu0 0.0
    %595 = vmatpush1.msra.mxu0 0.0
    %596 = vmatprep.subr.mxu0 0.0
    %597 = vmatpush1.msra.mxu0 0.0
    %598 = vmatprep.subr.mxu0 0.0
    %599 = vmatpush1.msra.mxu0 0.0
    %600 = vmatprep.subr.mxu0 0.0
    %601 = vmatpush1.msra.mxu0 0.0
    %602 = vmatprep.subr.mxu0 0.0
    %603 = vmatpush1.msra.mxu0 0.0
    %604 = vmatprep.subr.mxu0 0.0
    %605 = vmatpush1.msra.mxu0 0.0
    %606 = vmatprep.subr.mxu0 0.0
    %607 = vmatpush1.msra.mxu0 0.0
    %608 = vmatprep.subr.mxu0 0.0
    %609 = vmatpush1.msra.mxu0 0.0
    %610 = vmatprep.subr.mxu0 0.0
    %611 = vmatpush1.msra.mxu0 0.0
    %612 = vmatprep.subr.mxu0 0.0
    %613 = vmatpush1.msra.mxu0 0.0
    %614 = vmatprep.subr.mxu0 0.0
    %615 = vmatpush1.msra.mxu0 0.0
    %616 = vmatprep.subr.mxu0 0.0
    %617 = vmatpush1.msra.mxu0 0.0
    %618 = vmatprep.subr.mxu0 0.0
    %619 = vmatpush1.msra.mxu0 0.0
    %620 = vmatprep.subr.mxu0 0.0
    %621 = vmatpush1.msra.mxu0 0.0
    %622 = vmatprep.subr.mxu0 0.0
    %623 = vmatpush1.msra.mxu0 0.0
    %624 = vmatprep.subr.mxu0 0.0
    %625 = vmatpush1.msra.mxu0 0.0
    %626 = vmatprep.mubr.f32.mxu0 0.0
    %627 = vmatmul.mubr.f32.gmra.mrb[0].mxu0 %v560
    %v628 = vpop.f32.mrb[0].mxu0
    %v629 = vadd.f32 0.0, %v628
    %v630 = vpop.f32.mrb[0].mxu0
    %631 = vdwg.mxu0
    %v632 = vadd.f32 %v559, %v629
    %v633 = vtanh.pop %v632
    %v634 = vxor.u32 %v632, 2147483648
    %v635 = vmul.f32 %v634, 1.442695
    %v636 = vpow.pop %v635
    %v637 = vadd.f32 %v636, 1.0
    %v638 = vrcp.pop %v637
    %v639 = vmul.f32 1.0, %v638
    %v640 = vsel %vm238, %v633, %v639
    %v641 = vmul.f32 %v640, %v547
    %643 = vrot.lane.b32.xlu0 %v640, 64
    %v644 = vpop.permute.xlu0 %643
    %v646 = vmul.f32 %v640, %v644
    %648 = vrot.lane.b32.xlu0 %v646, 32
    %v649 = vpop.permute.xlu0 %648
    %v651 = vadd.f32 %v641, %v649
    %v652 = vtanh.pop %v651
    %654 = vrot.lane.b32.xlu0 %v652, 64
    %v655 = vpop.permute.xlu0 %654
    %v657 = vmul.f32 %v640, %v655
    %659 = vrot.lane.b32.xlu0 %v657, 32
    %v660 = vpop.permute.xlu0 %659
    %662 = vst.msk [vmem:[#allocation3 + $0x6] sm:$0x3] %vm349, %v660
    %v663 = vld [vmem:[#allocation2 + $0x8] sm:$0x3]
    %v664 = vsel %vm146, %v660, 0
    %666 = vmatprep.subr.mxu0 0.0
    %667 = vmatpush1.msra.mxu0 %v230
    %668 = vmatprep.subr.mxu0 0.0
    %669 = vmatpush1.msra.mxu0 %v231
    %670 = vmatprep.subr.mxu0 0.0
    %671 = vmatpush1.msra.mxu0 %v232
    %672 = vmatprep.subr.mxu0 0.0
    %673 = vmatpush1.msra.mxu0 %v233
    %674 = vmatprep.subr.mxu0 0.0
    %675 = vmatpush1.msra.mxu0 0.0
    %676 = vmatprep.subr.mxu0 0.0
    %677 = vmatpush1.msra.mxu0 0.0
    %678 = vmatprep.subr.mxu0 0.0
    %679 = vmatpush1.msra.mxu0 0.0
    %680 = vmatprep.subr.mxu0 0.0
    %681 = vmatpush1.msra.mxu0 0.0
    %682 = vmatprep.subr.mxu0 0.0
    %683 = vmatpush1.msra.mxu0 0.0
    %684 = vmatprep.subr.mxu0 0.0
    %685 = vmatpush1.msra.mxu0 0.0
    %686 = vmatprep.subr.mxu0 0.0
    %687 = vmatpush1.msra.mxu0 0.0
    %688 = vmatprep.subr.mxu0 0.0
    %689 = vmatpush1.msra.mxu0 0.0
    %690 = vmatprep.subr.mxu0 0.0
    %691 = vmatpush1.msra.mxu0 0.0
    %692 = vmatprep.subr.mxu0 0.0
    %693 = vmatpush1.msra.mxu0 0.0
    %694 = vmatprep.subr.mxu0 0.0
    %695 = vmatpush1.msra.mxu0 0.0
    %696 = vmatprep.subr.mxu0 0.0
    %697 = vmatpush1.msra.mxu0 0.0
    %698 = vmatprep.subr.mxu0 0.0
    %699 = vmatpush1.msra.mxu0 0.0
    %700 = vmatprep.subr.mxu0 0.0
    %701 = vmatpush1.msra.mxu0 0.0
    %702 = vmatprep.subr.mxu0 0.0
    %703 = vmatpush1.msra.mxu0 0.0
    %704 = vmatprep.subr.mxu0 0.0
    %705 = vmatpush1.msra.mxu0 0.0
    %706 = vmatprep.subr.mxu0 0.0
    %707 = vmatpush1.msra.mxu0 0.0
    %708 = vmatprep.subr.mxu0 0.0
    %709 = vmatpush1.msra.mxu0 0.0
    %710 = vmatprep.subr.mxu0 0.0
    %711 = vmatpush1.msra.mxu0 0.0
    %712 = vmatprep.subr.mxu0 0.0
    %713 = vmatpush1.msra.mxu0 0.0
    %714 = vmatprep.subr.mxu0 0.0
    %715 = vmatpush1.msra.mxu0 0.0
    %716 = vmatprep.subr.mxu0 0.0
    %717 = vmatpush1.msra.mxu0 0.0
    %718 = vmatprep.subr.mxu0 0.0
    %719 = vmatpush1.msra.mxu0 0.0
    %720 = vmatprep.subr.mxu0 0.0
    %721 = vmatpush1.msra.mxu0 0.0
    %722 = vmatprep.subr.mxu0 0.0
    %723 = vmatpush1.msra.mxu0 0.0
    %724 = vmatprep.subr.mxu0 0.0
    %725 = vmatpush1.msra.mxu0 0.0
    %726 = vmatprep.subr.mxu0 0.0
    %727 = vmatpush1.msra.mxu0 0.0
    %728 = vmatprep.subr.mxu0 0.0
    %729 = vmatpush1.msra.mxu0 0.0
    %730 = vmatprep.mubr.f32.mxu0 0.0
    %731 = vmatmul.mubr.f32.gmra.mrb[0].mxu0 %v664
    %v732 = vpop.f32.mrb[0].mxu0
    %v733 = vadd.f32 0.0, %v732
    %v734 = vpop.f32.mrb[0].mxu0
    %735 = vdwg.mxu0
    %v736 = vadd.f32 %v663, %v733
    %v737 = vtanh.pop %v736
    %v738 = vxor.u32 %v736, 2147483648
    %v739 = vmul.f32 %v738, 1.442695
    %v740 = vpow.pop %v739
    %v741 = vadd.f32 %v740, 1.0
    %v742 = vrcp.pop %v741
    %v743 = vmul.f32 1.0, %v742
    %v744 = vsel %vm238, %v737, %v743
    %v745 = vmul.f32 %v744, %v651
    %747 = vrot.lane.b32.xlu0 %v744, 64
    %v748 = vpop.permute.xlu0 %747
    %v750 = vmul.f32 %v744, %v748
    %752 = vrot.lane.b32.xlu0 %v750, 32
    %v753 = vpop.permute.xlu0 %752
    %v755 = vadd.f32 %v745, %v753
    %v756 = vtanh.pop %v755
    %758 = vrot.lane.b32.xlu0 %v756, 64
    %v759 = vpop.permute.xlu0 %758
    %v761 = vmul.f32 %v744, %v759
    %763 = vrot.lane.b32.xlu0 %v761, 32
    %v764 = vpop.permute.xlu0 %763
    %766 = vst.msk [vmem:[#allocation3 + $0x8] sm:$0x3] %vm349, %v764
    %v767 = vld [vmem:[#allocation2 + $0xa] sm:$0x3]
    %v768 = vsel %vm146, %v764, 0
    %770 = vmatprep.subr.mxu0 0.0
    %771 = vmatpush1.msra.mxu0 %v230
    %772 = vmatprep.subr.mxu0 0.0
    %773 = vmatpush1.msra.mxu0 %v231
    %774 = vmatprep.subr.mxu0 0.0
    %775 = vmatpush1.msra.mxu0 %v232
    %776 = vmatprep.subr.mxu0 0.0
    %777 = vmatpush1.msra.mxu0 %v233
    %778 = vmatprep.subr.mxu0 0.0
    %779 = vmatpush1.msra.mxu0 0.0
    %780 = vmatprep.subr.mxu0 0.0
    %781 = vmatpush1.msra.mxu0 0.0
    %782 = vmatprep.subr.mxu0 0.0
    %783 = vmatpush1.msra.mxu0 0.0
    %784 = vmatprep.subr.mxu0 0.0
    %785 = vmatpush1.msra.mxu0 0.0
    %786 = vmatprep.subr.mxu0 0.0
    %787 = vmatpush1.msra.mxu0 0.0
    %788 = vmatprep.subr.mxu0 0.0
    %789 = vmatpush1.msra.mxu0 0.0
    %790 = vmatprep.subr.mxu0 0.0
    %791 = vmatpush1.msra.mxu0 0.0
    %792 = vmatprep.subr.mxu0 0.0
    %793 = vmatpush1.msra.mxu0 0.0
    %794 = vmatprep.subr.mxu0 0.0
    %795 = vmatpush1.msra.mxu0 0.0
    %796 = vmatprep.subr.mxu0 0.0
    %797 = vmatpush1.msra.mxu0 0.0
    %798 = vmatprep.subr.mxu0 0.0
    %799 = vmatpush1.msra.mxu0 0.0
    %800 = vmatprep.subr.mxu0 0.0
    %801 = vmatpush1.msra.mxu0 0.0
    %802 = vmatprep.subr.mxu0 0.0
    %803 = vmatpush1.msra.mxu0 0.0
    %804 = vmatprep.subr.mxu0 0.0
    %805 = vmatpush1.msra.mxu0 0.0
    %806 = vmatprep.subr.mxu0 0.0
    %807 = vmatpush1.msra.mxu0 0.0
    %808 = vmatprep.subr.mxu0 0.0
    %809 = vmatpush1.msra.mxu0 0.0
    %810 = vmatprep.subr.mxu0 0.0
    %811 = vmatpush1.msra.mxu0 0.0
    %812 = vmatprep.subr.mxu0 0.0
    %813 = vmatpush1.msra.mxu0 0.0
    %814 = vmatprep.subr.mxu0 0.0
    %815 = vmatpush1.msra.mxu0 0.0
    %816 = vmatprep.subr.mxu0 0.0
    %817 = vmatpush1.msra.mxu0 0.0
    %818 = vmatprep.subr.mxu0 0.0
    %819 = vmatpush1.msra.mxu0 0.0
    %820 = vmatprep.subr.mxu0 0.0
    %821 = vmatpush1.msra.mxu0 0.0
    %822 = vmatprep.subr.mxu0 0.0
    %823 = vmatpush1.msra.mxu0 0.0
    %824 = vmatprep.subr.mxu0 0.0
    %825 = vmatpush1.msra.mxu0 0.0
    %826 = vmatprep.subr.mxu0 0.0
    %827 = vmatpush1.msra.mxu0 0.0
    %828 = vmatprep.subr.mxu0 0.0
    %829 = vmatpush1.msra.mxu0 0.0
    %830 = vmatprep.subr.mxu0 0.0
    %831 = vmatpush1.msra.mxu0 0.0
    %832 = vmatprep.subr.mxu0 0.0
    %833 = vmatpush1.msra.mxu0 0.0
    %834 = vmatprep.mubr.f32.mxu0 0.0
    %835 = vmatmul.mubr.f32.gmra.mrb[0].mxu0 %v768
    %v836 = vpop.f32.mrb[0].mxu0
    %v837 = vadd.f32 0.0, %v836
    %v838 = vpop.f32.mrb[0].mxu0
    %839 = vdwg.mxu0
    %v840 = vadd.f32 %v767, %v837
    %v841 = vtanh.pop %v840
    %v842 = vxor.u32 %v840, 2147483648
    %v843 = vmul.f32 %v842, 1.442695
    %v844 = vpow.pop %v843
    %v845 = vadd.f32 %v844, 1.0
    %v846 = vrcp.pop %v845
    %v847 = vmul.f32 1.0, %v846
    %v848 = vsel %vm238, %v841, %v847
    %v849 = vmul.f32 %v848, %v755
    %851 = vrot.lane.b32.xlu0 %v848, 64
    %v852 = vpop.permute.xlu0 %851
    %v854 = vmul.f32 %v848, %v852
    %856 = vrot.lane.b32.xlu0 %v854, 32
    %v857 = vpop.permute.xlu0 %856
    %v859 = vadd.f32 %v849, %v857
    %v860 = vtanh.pop %v859
    %862 = vrot.lane.b32.xlu0 %v860, 64
    %v863 = vpop.permute.xlu0 %862
    %v865 = vmul.f32 %v848, %v863
    %867 = vrot.lane.b32.xlu0 %v865, 32
    %v868 = vpop.permute.xlu0 %867
    %870 = vst.msk [vmem:[#allocation3 + $0xa] sm:$0x3] %vm349, %v868
    %v871 = vld [vmem:[#allocation2 + $0xc] sm:$0x3]
    %v872 = vsel %vm146, %v868, 0
    %874 = vmatprep.subr.mxu0 0.0
    %875 = vmatpush1.msra.mxu0 %v230
    %876 = vmatprep.subr.mxu0 0.0
    %877 = vmatpush1.msra.mxu0 %v231
    %878 = vmatprep.subr.mxu0 0.0
    %879 = vmatpush1.msra.mxu0 %v232
    %880 = vmatprep.subr.mxu0 0.0
    %881 = vmatpush1.msra.mxu0 %v233
    %882 = vmatprep.subr.mxu0 0.0
    %883 = vmatpush1.msra.mxu0 0.0
    %884 = vmatprep.subr.mxu0 0.0
    %885 = vmatpush1.msra.mxu0 0.0
    %886 = vmatprep.subr.mxu0 0.0
    %887 = vmatpush1.msra.mxu0 0.0
    %888 = vmatprep.subr.mxu0 0.0
    %889 = vmatpush1.msra.mxu0 0.0
    %890 = vmatprep.subr.mxu0 0.0
    %891 = vmatpush1.msra.mxu0 0.0
    %892 = vmatprep.subr.mxu0 0.0
    %893 = vmatpush1.msra.mxu0 0.0
    %894 = vmatprep.subr.mxu0 0.0
    %895 = vmatpush1.msra.mxu0 0.0
    %896 = vmatprep.subr.mxu0 0.0
    %897 = vmatpush1.msra.mxu0 0.0
    %898 = vmatprep.subr.mxu0 0.0
    %899 = vmatpush1.msra.mxu0 0.0
    %900 = vmatprep.subr.mxu0 0.0
    %901 = vmatpush1.msra.mxu0 0.0
    %902 = vmatprep.subr.mxu0 0.0
    %903 = vmatpush1.msra.mxu0 0.0
    %904 = vmatprep.subr.mxu0 0.0
    %905 = vmatpush1.msra.mxu0 0.0
    %906 = vmatprep.subr.mxu0 0.0
    %907 = vmatpush1.msra.mxu0 0.0
    %908 = vmatprep.subr.mxu0 0.0
    %909 = vmatpush1.msra.mxu0 0.0
    %910 = vmatprep.subr.mxu0 0.0
    %911 = vmatpush1.msra.mxu0 0.0
    %912 = vmatprep.subr.mxu0 0.0
    %913 = vmatpush1.msra.mxu0 0.0
    %914 = vmatprep.subr.mxu0 0.0
    %915 = vmatpush1.msra.mxu0 0.0
    %916 = vmatprep.subr.mxu0 0.0
    %917 = vmatpush1.msra.mxu0 0.0
    %918 = vmatprep.subr.mxu0 0.0
    %919 = vmatpush1.msra.mxu0 0.0
    %920 = vmatprep.subr.mxu0 0.0
    %921 = vmatpush1.msra.mxu0 0.0
    %922 = vmatprep.subr.mxu0 0.0
    %923 = vmatpush1.msra.mxu0 0.0
    %924 = vmatprep.subr.mxu0 0.0
    %925 = vmatpush1.msra.mxu0 0.0
    %926 = vmatprep.subr.mxu0 0.0
    %927 = vmatpush1.msra.mxu0 0.0
    %928 = vmatprep.subr.mxu0 0.0
    %929 = vmatpush1.msra.mxu0 0.0
    %930 = vmatprep.subr.mxu0 0.0
    %931 = vmatpush1.msra.mxu0 0.0
    %932 = vmatprep.subr.mxu0 0.0
    %933 = vmatpush1.msra.mxu0 0.0
    %934 = vmatprep.subr.mxu0 0.0
    %935 = vmatpush1.msra.mxu0 0.0
    %936 = vmatprep.subr.mxu0 0.0
    %937 = vmatpush1.msra.mxu0 0.0
    %938 = vmatprep.mubr.f32.mxu0 0.0
    %939 = vmatmul.mubr.f32.gmra.mrb[0].mxu0 %v872
    %v940 = vpop.f32.mrb[0].mxu0
    %v941 = vadd.f32 0.0, %v940
    %v942 = vpop.f32.mrb[0].mxu0
    %943 = vdwg.mxu0
    %v944 = vadd.f32 %v871, %v941
    %v945 = vtanh.pop %v944
    %v946 = vxor.u32 %v944, 2147483648
    %v947 = vmul.f32 %v946, 1.442695
    %v948 = vpow.pop %v947
    %v949 = vadd.f32 %v948, 1.0
    %v950 = vrcp.pop %v949
    %v951 = vmul.f32 1.0, %v950
    %v952 = vsel %vm238, %v945, %v951
    %v953 = vmul.f32 %v952, %v859
    %955 = vrot.lane.b32.xlu0 %v952, 64
    %v956 = vpop.permute.xlu0 %955
    %v958 = vmul.f32 %v952, %v956
    %960 = vrot.lane.b32.xlu0 %v958, 32
    %v961 = vpop.permute.xlu0 %960
    %v963 = vadd.f32 %v953, %v961
    %v964 = vtanh.pop %v963
    %966 = vrot.lane.b32.xlu0 %v964, 64
    %v967 = vpop.permute.xlu0 %966
    %v969 = vmul.f32 %v952, %v967
    %971 = vrot.lane.b32.xlu0 %v969, 32
    %v972 = vpop.permute.xlu0 %971
    %974 = vst.msk [vmem:[#allocation3 + $0xc] sm:$0x3] %vm349, %v972
    %v975 = vld [vmem:[#allocation2 + $0xe] sm:$0x3]
    %v976 = vsel %vm146, %v972, 0
    %978 = vmatprep.subr.mxu0 0.0
    %979 = vmatpush1.msra.mxu0 %v230
    %980 = vmatprep.subr.mxu0 0.0
    %981 = vmatpush1.msra.mxu0 %v231
    %982 = vmatprep.subr.mxu0 0.0
    %983 = vmatpush1.msra.mxu0 %v232
    %984 = vmatprep.subr.mxu0 0.0
    %985 = vmatpush1.msra.mxu0 %v233
    %986 = vmatprep.subr.mxu0 0.0
    %987 = vmatpush1.msra.mxu0 0.0
    %988 = vmatprep.subr.mxu0 0.0
    %989 = vmatpush1.msra.mxu0 0.0
    %990 = vmatprep.subr.mxu0 0.0
    %991 = vmatpush1.msra.mxu0 0.0
    %992 = vmatprep.subr.mxu0 0.0
    %993 = vmatpush1.msra.mxu0 0.0
    %994 = vmatprep.subr.mxu0 0.0
    %995 = vmatpush1.msra.mxu0 0.0
    %996 = vmatprep.subr.mxu0 0.0
    %997 = vmatpush1.msra.mxu0 0.0
    %998 = vmatprep.subr.mxu0 0.0
    %999 = vmatpush1.msra.mxu0 0.0
    %1000 = vmatprep.subr.mxu0 0.0
    %1001 = vmatpush1.msra.mxu0 0.0
    %1002 = vmatprep.subr.mxu0 0.0
    %1003 = vmatpush1.msra.mxu0 0.0
    %1004 = vmatprep.subr.mxu0 0.0
    %1005 = vmatpush1.msra.mxu0 0.0
    %1006 = vmatprep.subr.mxu0 0.0
    %1007 = vmatpush1.msra.mxu0 0.0
    %1008 = vmatprep.subr.mxu0 0.0
    %1009 = vmatpush1.msra.mxu0 0.0
    %1010 = vmatprep.subr.mxu0 0.0
    %1011 = vmatpush1.msra.mxu0 0.0
    %1012 = vmatprep.subr.mxu0 0.0
    %1013 = vmatpush1.msra.mxu0 0.0
    %1014 = vmatprep.subr.mxu0 0.0
    %1015 = vmatpush1.msra.mxu0 0.0
    %1016 = vmatprep.subr.mxu0 0.0
    %1017 = vmatpush1.msra.mxu0 0.0
    %1018 = vmatprep.subr.mxu0 0.0
    %1019 = vmatpush1.msra.mxu0 0.0
    %1020 = vmatprep.subr.mxu0 0.0
    %1021 = vmatpush1.msra.mxu0 0.0
    %1022 = vmatprep.subr.mxu0 0.0
    %1023 = vmatpush1.msra.mxu0 0.0
    %1024 = vmatprep.subr.mxu0 0.0
    %1025 = vmatpush1.msra.mxu0 0.0
    %1026 = vmatprep.subr.mxu0 0.0
    %1027 = vmatpush1.msra.mxu0 0.0
    %1028 = vmatprep.subr.mxu0 0.0
    %1029 = vmatpush1.msra.mxu0 0.0
    %1030 = vmatprep.subr.mxu0 0.0
    %1031 = vmatpush1.msra.mxu0 0.0
    %1032 = vmatprep.subr.mxu0 0.0
    %1033 = vmatpush1.msra.mxu0 0.0
    %1034 = vmatprep.subr.mxu0 0.0
    %1035 = vmatpush1.msra.mxu0 0.0
    %1036 = vmatprep.subr.mxu0 0.0
    %1037 = vmatpush1.msra.mxu0 0.0
    %1038 = vmatprep.subr.mxu0 0.0
    %1039 = vmatpush1.msra.mxu0 0.0
    %1040 = vmatprep.subr.mxu0 0.0
    %1041 = vmatpush1.msra.mxu0 0.0
    %1042 = vmatprep.mubr.f32.mxu0 0.0
    %1043 = vmatmul.mubr.f32.gmra.mrb[0].mxu0 %v976
    %v1044 = vpop.f32.mrb[0].mxu0
    %v1045 = vadd.f32 0.0, %v1044
    %v1046 = vpop.f32.mrb[0].mxu0
    %1047 = vdwg.mxu0
    %v1048 = vadd.f32 %v975, %v1045
    %v1049 = vtanh.pop %v1048
    %v1050 = vxor.u32 %v1048, 2147483648
    %v1051 = vmul.f32 %v1050, 1.442695
    %v1052 = vpow.pop %v1051
    %v1053 = vadd.f32 %v1052, 1.0
    %v1054 = vrcp.pop %v1053
    %v1055 = vmul.f32 1.0, %v1054
    %v1056 = vsel %vm238, %v1049, %v1055
    %v1057 = vmul.f32 %v1056, %v963
    %1059 = vrot.lane.b32.xlu0 %v1056, 64
    %v1060 = vpop.permute.xlu0 %1059
    %v1062 = vmul.f32 %v1056, %v1060
    %1064 = vrot.lane.b32.xlu0 %v1062, 32
    %v1065 = vpop.permute.xlu0 %1064
    %v1067 = vadd.f32 %v1057, %v1065
    %v1068 = vtanh.pop %v1067
    %1070 = vrot.lane.b32.xlu0 %v1068, 64
    %v1071 = vpop.permute.xlu0 %1070
    %v1073 = vmul.f32 %v1056, %v1071
    %1075 = vrot.lane.b32.xlu0 %v1073, 32
    %v1076 = vpop.permute.xlu0 %1075
    %1078 = vst.msk [vmem:[#allocation3 + $0xe] sm:$0x3] %vm349, %v1076
    %v1079 = vld [vmem:[#allocation3] sm:$0xff]
    %v1080 = vld [vmem:[#allocation3 + $0x8] sm:$0xff]
    %v1081 = vld [vmem:[%s8] sm:$0xff]
    %v1082 = vld [vmem:[%s8 + $0x8] sm:$0xff]
    %v1083 = vld [vmem:[%s8 + $0x10] sm:$0xff]
    %v1084 = vld [vmem:[%s8 + $0x18] sm:$0xff]
    %v1085 = vld [vmem:[%s9] sm:$0x1]
    %v1087 = vlaneseq
    %v1088 = vshrl.u32 %v1087, 7
    %v1089 = vsub.s32 0, %v1088
    %v1090 = vrot.slane %v1085, %v1089
    %v1093 = vsel %vm146, %v1079, 0
    %v1096 = vsel %vm146, %v1080, 0
    %1098 = vmatprep.subr.mxu0 0.0
    %1099 = vmatpush1.msra.mxu0 %v1081
    %1100 = vmatprep.subr.mxu0 0.0
    %1101 = vmatpush1.msra.mxu0 %v1082
    %1102 = vmatprep.subr.mxu0 0.0
    %1103 = vmatpush1.msra.mxu0 %v1083
    %1104 = vmatprep.subr.mxu0 0.0
    %1105 = vmatpush1.msra.mxu0 %v1084
    %1106 = vmatprep.subr.mxu0 0.0
    %1107 = vmatpush1.msra.mxu0 0.0
    %1108 = vmatprep.subr.mxu0 0.0
    %1109 = vmatpush1.msra.mxu0 0.0
    %1110 = vmatprep.subr.mxu0 0.0
    %1111 = vmatpush1.msra.mxu0 0.0
    %1112 = vmatprep.subr.mxu0 0.0
    %1113 = vmatpush1.msra.mxu0 0.0
    %1114 = vmatprep.subr.mxu0 0.0
    %1115 = vmatpush1.msra.mxu0 0.0
    %1116 = vmatprep.subr.mxu0 0.0
    %1117 = vmatpush1.msra.mxu0 0.0
    %1118 = vmatprep.subr.mxu0 0.0
    %1119 = vmatpush1.msra.mxu0 0.0
    %1120 = vmatprep.subr.mxu0 0.0
    %1121 = vmatpush1.msra.mxu0 0.0
    %1122 = vmatprep.subr.mxu0 0.0
    %1123 = vmatpush1.msra.mxu0 0.0
    %1124 = vmatprep.subr.mxu0 0.0
    %1125 = vmatpush1.msra.mxu0 0.0
    %1126 = vmatprep.subr.mxu0 0.0
    %1127 = vmatpush1.msra.mxu0 0.0
    %1128 = vmatprep.subr.mxu0 0.0
    %1129 = vmatpush1.msra.mxu0 0.0
    %1130 = vmatprep.subr.mxu0 0.0
    %1131 = vmatpush1.msra.mxu0 0.0
    %1132 = vmatprep.subr.mxu0 0.0
    %1133 = vmatpush1.msra.mxu0 0.0
    %1134 = vmatprep.subr.mxu0 0.0
    %1135 = vmatpush1.msra.mxu0 0.0
    %1136 = vmatprep.subr.mxu0 0.0
    %1137 = vmatpush1.msra.mxu0 0.0
    %1138 = vmatprep.subr.mxu0 0.0
    %1139 = vmatpush1.msra.mxu0 0.0
    %1140 = vmatprep.subr.mxu0 0.0
    %1141 = vmatpush1.msra.mxu0 0.0
    %1142 = vmatprep.subr.mxu0 0.0
    %1143 = vmatpush1.msra.mxu0 0.0
    %1144 = vmatprep.subr.mxu0 0.0
    %1145 = vmatpush1.msra.mxu0 0.0
    %1146 = vmatprep.subr.mxu0 0.0
    %1147 = vmatpush1.msra.mxu0 0.0
    %1148 = vmatprep.subr.mxu0 0.0
    %1149 = vmatpush1.msra.mxu0 0.0
    %1150 = vmatprep.subr.mxu0 0.0
    %1151 = vmatpush1.msra.mxu0 0.0
    %1152 = vmatprep.subr.mxu0 0.0
    %1153 = vmatpush1.msra.mxu0 0.0
    %1154 = vmatprep.subr.mxu0 0.0
    %1155 = vmatpush1.msra.mxu0 0.0
    %1156 = vmatprep.subr.mxu0 0.0
    %1157 = vmatpush1.msra.mxu0 0.0
    %1158 = vmatprep.subr.mxu0 0.0
    %1159 = vmatpush1.msra.mxu0 0.0
    %1160 = vmatprep.subr.mxu0 0.0
    %1161 = vmatpush1.msra.mxu0 0.0
    %1162 = vmatprep.mubr.f32.mxu0 0.0
    %1163 = vmatmul.mubr.f32.gmra.mrb[0].mxu0 %v1093
    %v1164 = vpop.f32.mrb[0].mxu0
    %v1165 = vadd.f32 %v1090, %v1164
    %v1166 = vpop.f32.mrb[0].mxu0
    %1167 = vmatprep.mubr.f32.mxu0 0.0
    %1168 = vmatmul.mubr.f32.gmra.mrb[0].mxu0 %v1096
    %v1169 = vpop.f32.mrb[0].mxu0
    %v1170 = vadd.f32 %v1090, %v1169
    %v1171 = vpop.f32.mrb[0].mxu0
    %1172 = vdwg.mxu0
    %vm1173 = vcmask 31744
    %1174 = vst.msk [vmem:[%s10] sm:$0xff] %vm1173, %v1165
    %1175 = vst.msk [vmem:[%s10 + $0x8] sm:$0xff] %vm1173, %v1170
    %1176 = vst.msk [vmem:[#allocation4] sm:$0x3] %vm349, %v1076
    %1178 = vrot.lane.b32.xlu0 %v1067, 96
    %v1179 = vpop.permute.xlu0 %1178
    %1181 = vst.msk [vmem:[#allocation6] sm:$0x3] %vm349, %v1179
    // Predicated region
    $region42: #{q_network_forward.1} parent=1 // pred_check
      _
    $region43: #{q_network_forward.1} parent=1 // pred_check_branch
      %1183 = sbr.rel (0) target = $region45
    $region44: #{q_network_forward.1} parent=1 // pred_region
      _
    $region45: #{q_network_forward.1} parent=1 // pred_fallthru
      _
    // Predicated region
    $region46: #{q_network_forward.1} parent=1 // pred_check
      _
    $region47: #{q_network_forward.1} parent=1 // pred_check_branch
      %1185 = sbr.rel (0) target = $region49
    $region48: #{q_network_forward.1} parent=1 // pred_region
      %s1187 = ssub.s32 32, 32
      %1188 = vsyncadd [#allocation5], %s1187
      %s1190 = sshll.u32 [#allocation4], 4
      %s1191 = int_to_ptr.vmem [resolvable:$true] %s1190
      %1193 = dma.vmem_to_hbm [thread:$0]  %s1191, 32, %s11, [#allocation5]
    $region49: #{q_network_forward.1} parent=1 // pred_fallthru
      _
    // Predicated region
    $region50: #{q_network_forward.1} parent=1 // pred_check
      _
    $region51: #{q_network_forward.1} parent=1 // pred_check_branch
      %1195 = sbr.rel (0) target = $region53
    $region52: #{q_network_forward.1} parent=1 // pred_region
      %s1197 = ssub.s32 32, 32
      %1198 = vsyncadd [#allocation7], %s1197
      %s1200 = sshll.u32 [#allocation6], 4
      %s1201 = int_to_ptr.vmem [resolvable:$true] %s1200
      %1203 = dma.vmem_to_hbm [thread:$0]  %s1201, 32, %s12, [#allocation7]
    $region53: #{q_network_forward.1} parent=1 // pred_fallthru
      _
    // Predicated region
    $region54: #{q_network_forward.1} parent=1 // pred_check
      _
    $region55: #{q_network_forward.1} parent=1 // pred_check_branch
      %1205 = sbr.rel (0) target = $region57
    $region56: #{q_network_forward.1} parent=1 // pred_region
      _
    $region57: #{q_network_forward.1} parent=1 // pred_fallthru
      _
    // Predicated region
    $region58: #{q_network_forward.1} parent=1 // pred_check
      _
    $region59: #{q_network_forward.1} parent=1 // pred_check_branch
      %1207 = sbr.rel (0) target = $region61
    $region60: #{q_network_forward.1} parent=1 // pred_region
      %1208 = dma.done [#allocation5], 32
    $region61: #{q_network_forward.1} parent=1 // pred_fallthru
      _
    // Predicated region
    $region62: #{q_network_forward.1} parent=1 // pred_check
      _
    $region63: #{q_network_forward.1} parent=1 // pred_check_branch
      %1210 = sbr.rel (0) target = $region65
    $region64: #{q_network_forward.1} parent=1 // pred_region
      %1211 = dma.done [#allocation7], 32
    $region65: #{q_network_forward.1} parent=1 // pred_fallthru
      _
    %1212 = vsyncpa [#allocation5], 1
    %1213 = vsyncpa [#allocation7], 1

</llo_original>
